<compile_context>
chip_gen: v6e
topology: v6e:2x2x1
jax: 0.10.0
libtpu: 0.0.40
codegen_flags: <defaults>
</compile_context>

<pallas_src>
import jax
import jax.numpy as jnp
from jax.experimental import pallas as pl
from jax.experimental.pallas import tpu as pltpu

# ---- module hyper-parameters (the PyTorch code's globals) --------------------
VOCAB = 64
EMB_DIM = 10
N_FEATS = 8                    # 8 embedded columns -> LSTM input size 80
LSTM_IN = N_FEATS * EMB_DIM    # 80
HIDDEN_SIZE = 32
USE_DAY = 8                    # sequence length T
OUTPUT_SIZE = 4
NUM_LAYERS = 2                 # kernel below is specialized to 2 layers
BATCH = 2


# ---------------------------------------------------------------------------
# Fused kernel: LSTM layer 1 -> LSTM layer 2 -> reshape(-1, H*T) -> Linear.
# Gate order follows PyTorch: [i, f, g, o].
# ---------------------------------------------------------------------------
def _fused_lstm_fc_kernel(x_ref, wih1_ref, whh1_ref, b1_ref,
                          wih2_ref, whh2_ref, b2_ref,
                          fcw_ref, fcb_ref, out_ref):
    f32 = jnp.float32
    T, B, H = USE_DAY, BATCH, HIDDEN_SIZE

    # g-gate lane mask, hoisted once (constant across both layers / all steps).
    lane = jax.lax.broadcasted_iota(jnp.int32, (B, 4 * H), 1)
    is_g = (lane >= 2 * H) & (lane < 3 * H)

    def run_layer(gx, whh):
        """gx: (T*B, 4H) input-side gate pre-activations (bias already added)."""
        h = jnp.zeros((B, H), f32)
        c = jnp.zeros((B, H), f32)
        hs = []
        for t in range(T):                                  # fully unrolled
            gates = gx[t * B:(t + 1) * B, :] + jnp.dot(
                h, whh, preferred_element_type=f32)          # (B, 4H)
            # full-vreg activations; tanh only on the g slot via lane select
            act = jnp.where(is_g, jnp.tanh(gates), jax.nn.sigmoid(gates))
            i_g = act[:, 0 * H:1 * H]
            f_g = act[:, 1 * H:2 * H]
            g_g = act[:, 2 * H:3 * H]
            o_g = act[:, 3 * H:4 * H]
            c = f_g * c + i_g * g_g
            h = o_g * jnp.tanh(c)
            hs.append(h)
        return hs

    # ---- layer 1: batched input projection hoisted out of the recurrence ----
    gx1 = jnp.dot(x_ref[...], wih1_ref[...], preferred_element_type=f32) + b1_ref[...]
    hs1 = run_layer(gx1, whh1_ref[...])

    # ---- layer 2: its input projection is one batched matmul on layer-1 outs ----
    h1_all = jnp.concatenate(hs1, axis=0)                                  # (T*B, H)
    gx2 = jnp.dot(h1_all, wih2_ref[...], preferred_element_type=f32) + b2_ref[...]
    hs2 = run_layer(gx2, whh2_ref[...])

    # ---- verbatim out.reshape(-1, H*T), assembled lane-dense, then the FC ----
    rows = []
    for r in range(B):                      # reshape(-1, H*T) has (T*B)//T = B rows
        pieces = []
        for j in range(T):
            k = r * T + j                   # flat (t, b) chunk: t = k // B, b = k % B
            pieces.append(hs2[k // B][k % B:k % B + 1, :])                 # (1, H)
        rows.append(jnp.concatenate(pieces, axis=1))                       # (1, T*H)
    out2d = jnp.concatenate(rows, axis=0)                                  # (B, T*H)
    out_ref[...] = (
        jnp.dot(out2d, fcw_ref[...], preferred_element_type=f32) + fcb_ref[...]
    )


def fused_forward_pallas(x2d, w_ih1_t, w_hh1_t, b1, w_ih2_t, w_hh2_t, b2,
                         fc_w_t, fc_b):
    """x2d: (T*B, 80); w_ih*_t: (In, 4H); w_hh*_t: (H, 4H); b*: (1, 4H);
    fc_w_t: (H*T, OUT); fc_b: (1, OUT)."""
    TB, IN = x2d.shape
    H = HIDDEN_SIZE
    return pl.pallas_call(
        _fused_lstm_fc_kernel,
        out_shape=jax.ShapeDtypeStruct((BATCH, OUTPUT_SIZE), jnp.float32),
        grid_spec=pltpu.PrefetchScalarGridSpec(
            num_scalar_prefetch=0,
            grid=(1,),
            in_specs=[
                pl.BlockSpec((TB, IN), lambda i: (0, 0)),
                pl.BlockSpec((IN, 4 * H), lambda i: (0, 0)),
                pl.BlockSpec((H, 4 * H), lambda i: (0, 0)),
                pl.BlockSpec((1, 4 * H), lambda i: (0, 0)),
                pl.BlockSpec((H, 4 * H), lambda i: (0, 0)),
                pl.BlockSpec((H, 4 * H), lambda i: (0, 0)),
                pl.BlockSpec((1, 4 * H), lambda i: (0, 0)),
                pl.BlockSpec((H * USE_DAY, OUTPUT_SIZE), lambda i: (0, 0)),
                pl.BlockSpec((1, OUTPUT_SIZE), lambda i: (0, 0)),
            ],
            out_specs=pl.BlockSpec((BATCH, OUTPUT_SIZE), lambda i: (0, 0)),
        ),
        compiler_params=pltpu.CompilerParams(
            dimension_semantics=("arbitrary",)),   # single invocation, serial work
    )(x2d, w_ih1_t, w_hh1_t, b1, w_ih2_t, w_hh2_t, b2, fc_w_t, fc_b)


# ---------------------------------------------------------------------------
# Parameter construction (deterministic, synthetic — mirrors nn.Module shapes)
# ---------------------------------------------------------------------------
def init_params(key):
    ks = jax.random.split(key, 3 + 4 * NUM_LAYERS)
    params = {}
    params["embedding"] = 0.1 * jax.random.normal(ks[0], (VOCAB, EMB_DIM), jnp.float32)
    lstm = []
    for l in range(NUM_LAYERS):
        in_sz = LSTM_IN if l == 0 else HIDDEN_SIZE
        k0, k1, k2, k3 = ks[3 + 4 * l: 3 + 4 * (l + 1)]
        s = 1.0 / jnp.sqrt(HIDDEN_SIZE)
        lstm.append(dict(
            w_ih=jax.random.uniform(k0, (4 * HIDDEN_SIZE, in_sz), jnp.float32, -s, s),
            w_hh=jax.random.uniform(k1, (4 * HIDDEN_SIZE, HIDDEN_SIZE), jnp.float32, -s, s),
            b_ih=jax.random.uniform(k2, (4 * HIDDEN_SIZE,), jnp.float32, -s, s),
            b_hh=jax.random.uniform(k3, (4 * HIDDEN_SIZE,), jnp.float32, -s, s),
        ))
    params["lstm"] = lstm
    params["fc_w"] = 0.05 * jax.random.normal(
        ks[1], (OUTPUT_SIZE, HIDDEN_SIZE * USE_DAY), jnp.float32)
    params["fc_b"] = 0.05 * jax.random.normal(ks[2], (OUTPUT_SIZE,), jnp.float32)
    return params


# ---------------------------------------------------------------------------
# Forward pass (embedding gather in XLA; LSTM x2 + reshape + FC in one kernel)
# ---------------------------------------------------------------------------
@jax.jit
def lstm_forward(params, x):
    x = x.astype(jnp.int32)                                  # x.long()
    T, B, F = x.shape
    # 8 embedding lookups concatenated on the last axis == one flat gather
    # TODO(synk): embedding gather kept in XLA (no win from a Pallas gather here).
    emb = jnp.take(params["embedding"], x.reshape(-1), axis=0)
    emb = emb.reshape(T * B, F * EMB_DIM)                    # (T*B, 80)
    l1, l2 = params["lstm"]
    return fused_forward_pallas(
        emb,
        l1["w_ih"].T, l1["w_hh"].T, (l1["b_ih"] + l1["b_hh"]).reshape(1, -1),
        l2["w_ih"].T, l2["w_hh"].T, (l2["b_ih"] + l2["b_hh"]).reshape(1, -1),
        params["fc_w"].T, params["fc_b"].reshape(1, -1),
    )


# ---------------------------------------------------------------------------
# Pure-JAX reference (lax.scan LSTM) for a correctness check.
# ---------------------------------------------------------------------------
def lstm_forward_ref(params, x):
    x = x.astype(jnp.int32)
    embs = [jnp.take(params["embedding"], x[:, :, i], axis=0) for i in range(N_FEATS)]
    h_seq = jnp.concatenate(embs, axis=-1)
    H = HIDDEN_SIZE
    for layer in params["lstm"]:
        w_ih_t, w_hh_t = layer["w_ih"].T, layer["w_hh"].T
        b = layer["b_ih"] + layer["b_hh"]

        def step(carry, x_t):
            h, c = carry
            g = x_t @ w_ih_t + h @ w_hh_t + b
            i = jax.nn.sigmoid(g[:, :H])
            f = jax.nn.sigmoid(g[:, H:2 * H])
            gg = jnp.tanh(g[:, 2 * H:3 * H])
            o = jax.nn.sigmoid(g[:, 3 * H:])
            c = f * c + i * gg
            h = o * jnp.tanh(c)
            return (h, c), h

        init = (jnp.zeros((x.shape[1], H), jnp.float32),
                jnp.zeros((x.shape[1], H), jnp.float32))
        _, h_seq = jax.lax.scan(step, init, h_seq)
    out2d = h_seq.reshape(-1, HIDDEN_SIZE * USE_DAY)
    return out2d @ params["fc_w"].T + params["fc_b"]


if __name__ == "__main__":
    key = jax.random.PRNGKey(0)
    pk, xk = jax.random.split(key)
    params = init_params(pk)
    # input: (USE_DAY, BATCH, 8) integer feature ids in [0, 64)
    x = jax.random.randint(xk, (USE_DAY, BATCH, N_FEATS), 0, VOCAB, dtype=jnp.int32)

    out = lstm_forward(params, x)
    out = jax.block_until_ready(out)
    assert out.shape == (BATCH, OUTPUT_SIZE), out.shape

    ref = lstm_forward_ref(params, x)
    assert jnp.allclose(out, ref, atol=1e-4, rtol=1e-4), (out, ref)

    print("KERNEL_OK")
</pallas_src>

<mosaic_0001>
module attributes {stable_mosaic.version = 11 : i64} {
  func.func @_fused_lstm_fc_kernel(%arg0: i32, %arg1: memref<16x80xf32, #tpu.memory_space<vmem>>, %arg2: memref<80x128xf32, #tpu.memory_space<vmem>>, %arg3: memref<32x128xf32, #tpu.memory_space<vmem>>, %arg4: memref<1x128xf32, #tpu.memory_space<vmem>>, %arg5: memref<32x128xf32, #tpu.memory_space<vmem>>, %arg6: memref<32x128xf32, #tpu.memory_space<vmem>>, %arg7: memref<1x128xf32, #tpu.memory_space<vmem>>, %arg8: memref<256x4xf32, #tpu.memory_space<vmem>>, %arg9: memref<1x4xf32, #tpu.memory_space<vmem>>, %arg10: memref<2x4xf32, #tpu.memory_space<vmem>>) attributes {dimension_semantics = [#tpu.dimension_semantics<arbitrary>], iteration_bounds = array<i64: 1>, scalar_prefetch = 0 : i64, scratch_operands = 0 : i64, tpu.core_type = #tpu.core_type<tc>, window_params = [{pipeline_mode = #tpu.pipeline_mode<synchronous>, transform_indices = @transform_0, window_bounds = array<i64: 16, 80>}, {pipeline_mode = #tpu.pipeline_mode<synchronous>, transform_indices = @transform_1, window_bounds = array<i64: 80, 128>}, {pipeline_mode = #tpu.pipeline_mode<synchronous>, transform_indices = @transform_2, window_bounds = array<i64: 32, 128>}, {pipeline_mode = #tpu.pipeline_mode<synchronous>, transform_indices = @transform_3, window_bounds = array<i64: 1, 128>}, {pipeline_mode = #tpu.pipeline_mode<synchronous>, transform_indices = @transform_4, window_bounds = array<i64: 32, 128>}, {pipeline_mode = #tpu.pipeline_mode<synchronous>, transform_indices = @transform_5, window_bounds = array<i64: 32, 128>}, {pipeline_mode = #tpu.pipeline_mode<synchronous>, transform_indices = @transform_6, window_bounds = array<i64: 1, 128>}, {pipeline_mode = #tpu.pipeline_mode<synchronous>, transform_indices = @transform_7, window_bounds = array<i64: 256, 4>}, {pipeline_mode = #tpu.pipeline_mode<synchronous>, transform_indices = @transform_8, window_bounds = array<i64: 1, 4>}, {pipeline_mode = #tpu.pipeline_mode<synchronous>, transform_indices = @transform_9, window_bounds = array<i64: 2, 4>}]} {
    %0 = tpu.iota {dimensions = array<i32: 1>} : vector<2x128xi32>
    %c64_i32 = arith.constant 64 : i32
    %1 = vector.broadcast %c64_i32 : i32 to vector<2x128xi32>
    %2 = arith.cmpi sge, %0, %1 : vector<2x128xi32>
    %c96_i32 = arith.constant 96 : i32
    %3 = vector.broadcast %c96_i32 : i32 to vector<2x128xi32>
    %4 = arith.cmpi slt, %0, %3 : vector<2x128xi32>
    %5 = arith.andi %2, %4 : vector<2x128xi1>
    %c0 = arith.constant 0 : index
    %c0_0 = arith.constant 0 : index
    %6 = vector.load %arg1[%c0, %c0_0] : memref<16x80xf32, #tpu.memory_space<vmem>>, vector<16x80xf32>
    %c0_1 = arith.constant 0 : index
    %c0_2 = arith.constant 0 : index
    %7 = vector.load %arg2[%c0_1, %c0_2] : memref<80x128xf32, #tpu.memory_space<vmem>>, vector<80x128xf32>
    %cst = arith.constant dense<0.000000e+00> : vector<16x128xf32>
    %8 = tpu.matmul %6, %7, %cst {dimension_numbers = #tpu.dot_dimension_numbers<[1], [0], [0], [1], [0, 0, 1, 1], [], []>} : vector<16x80xf32>, vector<80x128xf32>, vector<16x128xf32> -> vector<16x128xf32>
    %c0_3 = arith.constant 0 : index
    %c0_4 = arith.constant 0 : index
    %9 = vector.load %arg4[%c0_3, %c0_4] : memref<1x128xf32, #tpu.memory_space<vmem>>, vector<1x128xf32>
    %10 = vector.broadcast %9 : vector<1x128xf32> to vector<16x128xf32>
    %11 = arith.addf %8, %10 : vector<16x128xf32>
    %c0_5 = arith.constant 0 : index
    %c0_6 = arith.constant 0 : index
    %12 = vector.load %arg3[%c0_5, %c0_6] : memref<32x128xf32, #tpu.memory_space<vmem>>, vector<32x128xf32>
    %cst_7 = arith.constant 0.000000e+00 : f32
    %13 = vector.broadcast %cst_7 : f32 to vector<2x32xf32>
    %cst_8 = arith.constant 0.000000e+00 : f32
    %14 = vector.broadcast %cst_8 : f32 to vector<2x32xf32>
    %15 = vector.extract_strided_slice %11 {offsets = [0, 0], sizes = [2, 128], strides = [1, 1]} : vector<16x128xf32> to vector<2x128xf32>
    %cst_9 = arith.constant dense<0.000000e+00> : vector<2x128xf32>
    %16 = tpu.matmul %13, %12, %cst_9 {dimension_numbers = #tpu.dot_dimension_numbers<[1], [0], [0], [1], [0, 0, 1, 1], [], []>} : vector<2x32xf32>, vector<32x128xf32>, vector<2x128xf32> -> vector<2x128xf32>
    %17 = arith.addf %15, %16 : vector<2x128xf32>
    %18 = math.tanh %17 : vector<2x128xf32>
    %19 = arith.negf %17 : vector<2x128xf32>
    %20 = math.exp %19 : vector<2x128xf32>
    %cst_10 = arith.constant 1.000000e+00 : f32
    %21 = vector.broadcast %cst_10 : f32 to vector<2x128xf32>
    %22 = arith.addf %21, %20 : vector<2x128xf32>
    %23 = arith.divf %21, %22 : vector<2x128xf32>
    %24 = arith.select %5, %18, %23 : vector<2x128xi1>, vector<2x128xf32>
    %25 = vector.extract_strided_slice %24 {offsets = [0, 0], sizes = [2, 32], strides = [1, 1]} : vector<2x128xf32> to vector<2x32xf32>
    %26 = vector.extract_strided_slice %24 {offsets = [0, 32], sizes = [2, 32], strides = [1, 1]} : vector<2x128xf32> to vector<2x32xf32>
    %27 = vector.extract_strided_slice %24 {offsets = [0, 64], sizes = [2, 32], strides = [1, 1]} : vector<2x128xf32> to vector<2x32xf32>
    %28 = vector.extract_strided_slice %24 {offsets = [0, 96], sizes = [2, 32], strides = [1, 1]} : vector<2x128xf32> to vector<2x32xf32>
    %29 = arith.mulf %26, %14 : vector<2x32xf32>
    %30 = arith.mulf %25, %27 : vector<2x32xf32>
    %31 = arith.addf %29, %30 : vector<2x32xf32>
    %32 = math.tanh %31 : vector<2x32xf32>
    %33 = arith.mulf %28, %32 : vector<2x32xf32>
    %34 = vector.extract_strided_slice %11 {offsets = [2, 0], sizes = [2, 128], strides = [1, 1]} : vector<16x128xf32> to vector<2x128xf32>
    %cst_11 = arith.constant dense<0.000000e+00> : vector<2x128xf32>
    %35 = tpu.matmul %33, %12, %cst_11 {dimension_numbers = #tpu.dot_dimension_numbers<[1], [0], [0], [1], [0, 0, 1, 1], [], []>} : vector<2x32xf32>, vector<32x128xf32>, vector<2x128xf32> -> vector<2x128xf32>
    %36 = arith.addf %34, %35 : vector<2x128xf32>
    %37 = math.tanh %36 : vector<2x128xf32>
    %38 = arith.negf %36 : vector<2x128xf32>
    %39 = math.exp %38 : vector<2x128xf32>
    %cst_12 = arith.constant 1.000000e+00 : f32
    %40 = vector.broadcast %cst_12 : f32 to vector<2x128xf32>
    %41 = arith.addf %40, %39 : vector<2x128xf32>
    %42 = arith.divf %40, %41 : vector<2x128xf32>
    %43 = arith.select %5, %37, %42 : vector<2x128xi1>, vector<2x128xf32>
    %44 = vector.extract_strided_slice %43 {offsets = [0, 0], sizes = [2, 32], strides = [1, 1]} : vector<2x128xf32> to vector<2x32xf32>
    %45 = vector.extract_strided_slice %43 {offsets = [0, 32], sizes = [2, 32], strides = [1, 1]} : vector<2x128xf32> to vector<2x32xf32>
    %46 = vector.extract_strided_slice %43 {offsets = [0, 64], sizes = [2, 32], strides = [1, 1]} : vector<2x128xf32> to vector<2x32xf32>
    %47 = vector.extract_strided_slice %43 {offsets = [0, 96], sizes = [2, 32], strides = [1, 1]} : vector<2x128xf32> to vector<2x32xf32>
    %48 = arith.mulf %45, %31 : vector<2x32xf32>
    %49 = arith.mulf %44, %46 : vector<2x32xf32>
    %50 = arith.addf %48, %49 : vector<2x32xf32>
    %51 = math.tanh %50 : vector<2x32xf32>
    %52 = arith.mulf %47, %51 : vector<2x32xf32>
    %53 = vector.extract_strided_slice %11 {offsets = [4, 0], sizes = [2, 128], strides = [1, 1]} : vector<16x128xf32> to vector<2x128xf32>
    %cst_13 = arith.constant dense<0.000000e+00> : vector<2x128xf32>
    %54 = tpu.matmul %52, %12, %cst_13 {dimension_numbers = #tpu.dot_dimension_numbers<[1], [0], [0], [1], [0, 0, 1, 1], [], []>} : vector<2x32xf32>, vector<32x128xf32>, vector<2x128xf32> -> vector<2x128xf32>
    %55 = arith.addf %53, %54 : vector<2x128xf32>
    %56 = math.tanh %55 : vector<2x128xf32>
    %57 = arith.negf %55 : vector<2x128xf32>
    %58 = math.exp %57 : vector<2x128xf32>
    %cst_14 = arith.constant 1.000000e+00 : f32
    %59 = vector.broadcast %cst_14 : f32 to vector<2x128xf32>
    %60 = arith.addf %59, %58 : vector<2x128xf32>
    %61 = arith.divf %59, %60 : vector<2x128xf32>
    %62 = arith.select %5, %56, %61 : vector<2x128xi1>, vector<2x128xf32>
    %63 = vector.extract_strided_slice %62 {offsets = [0, 0], sizes = [2, 32], strides = [1, 1]} : vector<2x128xf32> to vector<2x32xf32>
    %64 = vector.extract_strided_slice %62 {offsets = [0, 32], sizes = [2, 32], strides = [1, 1]} : vector<2x128xf32> to vector<2x32xf32>
    %65 = vector.extract_strided_slice %62 {offsets = [0, 64], sizes = [2, 32], strides = [1, 1]} : vector<2x128xf32> to vector<2x32xf32>
    %66 = vector.extract_strided_slice %62 {offsets = [0, 96], sizes = [2, 32], strides = [1, 1]} : vector<2x128xf32> to vector<2x32xf32>
    %67 = arith.mulf %64, %50 : vector<2x32xf32>
    %68 = arith.mulf %63, %65 : vector<2x32xf32>
    %69 = arith.addf %67, %68 : vector<2x32xf32>
    %70 = math.tanh %69 : vector<2x32xf32>
    %71 = arith.mulf %66, %70 : vector<2x32xf32>
    %72 = vector.extract_strided_slice %11 {offsets = [6, 0], sizes = [2, 128], strides = [1, 1]} : vector<16x128xf32> to vector<2x128xf32>
    %cst_15 = arith.constant dense<0.000000e+00> : vector<2x128xf32>
    %73 = tpu.matmul %71, %12, %cst_15 {dimension_numbers = #tpu.dot_dimension_numbers<[1], [0], [0], [1], [0, 0, 1, 1], [], []>} : vector<2x32xf32>, vector<32x128xf32>, vector<2x128xf32> -> vector<2x128xf32>
    %74 = arith.addf %72, %73 : vector<2x128xf32>
    %75 = math.tanh %74 : vector<2x128xf32>
    %76 = arith.negf %74 : vector<2x128xf32>
    %77 = math.exp %76 : vector<2x128xf32>
    %cst_16 = arith.constant 1.000000e+00 : f32
    %78 = vector.broadcast %cst_16 : f32 to vector<2x128xf32>
    %79 = arith.addf %78, %77 : vector<2x128xf32>
    %80 = arith.divf %78, %79 : vector<2x128xf32>
    %81 = arith.select %5, %75, %80 : vector<2x128xi1>, vector<2x128xf32>
    %82 = vector.extract_strided_slice %81 {offsets = [0, 0], sizes = [2, 32], strides = [1, 1]} : vector<2x128xf32> to vector<2x32xf32>
    %83 = vector.extract_strided_slice %81 {offsets = [0, 32], sizes = [2, 32], strides = [1, 1]} : vector<2x128xf32> to vector<2x32xf32>
    %84 = vector.extract_strided_slice %81 {offsets = [0, 64], sizes = [2, 32], strides = [1, 1]} : vector<2x128xf32> to vector<2x32xf32>
    %85 = vector.extract_strided_slice %81 {offsets = [0, 96], sizes = [2, 32], strides = [1, 1]} : vector<2x128xf32> to vector<2x32xf32>
    %86 = arith.mulf %83, %69 : vector<2x32xf32>
    %87 = arith.mulf %82, %84 : vector<2x32xf32>
    %88 = arith.addf %86, %87 : vector<2x32xf32>
    %89 = math.tanh %88 : vector<2x32xf32>
    %90 = arith.mulf %85, %89 : vector<2x32xf32>
    %91 = vector.extract_strided_slice %11 {offsets = [8, 0], sizes = [2, 128], strides = [1, 1]} : vector<16x128xf32> to vector<2x128xf32>
    %cst_17 = arith.constant dense<0.000000e+00> : vector<2x128xf32>
    %92 = tpu.matmul %90, %12, %cst_17 {dimension_numbers = #tpu.dot_dimension_numbers<[1], [0], [0], [1], [0, 0, 1, 1], [], []>} : vector<2x32xf32>, vector<32x128xf32>, vector<2x128xf32> -> vector<2x128xf32>
    %93 = arith.addf %91, %92 : vector<2x128xf32>
    %94 = math.tanh %93 : vector<2x128xf32>
    %95 = arith.negf %93 : vector<2x128xf32>
    %96 = math.exp %95 : vector<2x128xf32>
    %cst_18 = arith.constant 1.000000e+00 : f32
    %97 = vector.broadcast %cst_18 : f32 to vector<2x128xf32>
    %98 = arith.addf %97, %96 : vector<2x128xf32>
    %99 = arith.divf %97, %98 : vector<2x128xf32>
    %100 = arith.select %5, %94, %99 : vector<2x128xi1>, vector<2x128xf32>
    %101 = vector.extract_strided_slice %100 {offsets = [0, 0], sizes = [2, 32], strides = [1, 1]} : vector<2x128xf32> to vector<2x32xf32>
    %102 = vector.extract_strided_slice %100 {offsets = [0, 32], sizes = [2, 32], strides = [1, 1]} : vector<2x128xf32> to vector<2x32xf32>
    %103 = vector.extract_strided_slice %100 {offsets = [0, 64], sizes = [2, 32], strides = [1, 1]} : vector<2x128xf32> to vector<2x32xf32>
    %104 = vector.extract_strided_slice %100 {offsets = [0, 96], sizes = [2, 32], strides = [1, 1]} : vector<2x128xf32> to vector<2x32xf32>
    %105 = arith.mulf %102, %88 : vector<2x32xf32>
    %106 = arith.mulf %101, %103 : vector<2x32xf32>
    %107 = arith.addf %105, %106 : vector<2x32xf32>
    %108 = math.tanh %107 : vector<2x32xf32>
    %109 = arith.mulf %104, %108 : vector<2x32xf32>
    %110 = vector.extract_strided_slice %11 {offsets = [10, 0], sizes = [2, 128], strides = [1, 1]} : vector<16x128xf32> to vector<2x128xf32>
    %cst_19 = arith.constant dense<0.000000e+00> : vector<2x128xf32>
    %111 = tpu.matmul %109, %12, %cst_19 {dimension_numbers = #tpu.dot_dimension_numbers<[1], [0], [0], [1], [0, 0, 1, 1], [], []>} : vector<2x32xf32>, vector<32x128xf32>, vector<2x128xf32> -> vector<2x128xf32>
    %112 = arith.addf %110, %111 : vector<2x128xf32>
    %113 = math.tanh %112 : vector<2x128xf32>
    %114 = arith.negf %112 : vector<2x128xf32>
    %115 = math.exp %114 : vector<2x128xf32>
    %cst_20 = arith.constant 1.000000e+00 : f32
    %116 = vector.broadcast %cst_20 : f32 to vector<2x128xf32>
    %117 = arith.addf %116, %115 : vector<2x128xf32>
    %118 = arith.divf %116, %117 : vector<2x128xf32>
    %119 = arith.select %5, %113, %118 : vector<2x128xi1>, vector<2x128xf32>
    %120 = vector.extract_strided_slice %119 {offsets = [0, 0], sizes = [2, 32], strides = [1, 1]} : vector<2x128xf32> to vector<2x32xf32>
    %121 = vector.extract_strided_slice %119 {offsets = [0, 32], sizes = [2, 32], strides = [1, 1]} : vector<2x128xf32> to vector<2x32xf32>
    %122 = vector.extract_strided_slice %119 {offsets = [0, 64], sizes = [2, 32], strides = [1, 1]} : vector<2x128xf32> to vector<2x32xf32>
    %123 = vector.extract_strided_slice %119 {offsets = [0, 96], sizes = [2, 32], strides = [1, 1]} : vector<2x128xf32> to vector<2x32xf32>
    %124 = arith.mulf %121, %107 : vector<2x32xf32>
    %125 = arith.mulf %120, %122 : vector<2x32xf32>
    %126 = arith.addf %124, %125 : vector<2x32xf32>
    %127 = math.tanh %126 : vector<2x32xf32>
    %128 = arith.mulf %123, %127 : vector<2x32xf32>
    %129 = vector.extract_strided_slice %11 {offsets = [12, 0], sizes = [2, 128], strides = [1, 1]} : vector<16x128xf32> to vector<2x128xf32>
    %cst_21 = arith.constant dense<0.000000e+00> : vector<2x128xf32>
    %130 = tpu.matmul %128, %12, %cst_21 {dimension_numbers = #tpu.dot_dimension_numbers<[1], [0], [0], [1], [0, 0, 1, 1], [], []>} : vector<2x32xf32>, vector<32x128xf32>, vector<2x128xf32> -> vector<2x128xf32>
    %131 = arith.addf %129, %130 : vector<2x128xf32>
    %132 = math.tanh %131 : vector<2x128xf32>
    %133 = arith.negf %131 : vector<2x128xf32>
    %134 = math.exp %133 : vector<2x128xf32>
    %cst_22 = arith.constant 1.000000e+00 : f32
    %135 = vector.broadcast %cst_22 : f32 to vector<2x128xf32>
    %136 = arith.addf %135, %134 : vector<2x128xf32>
    %137 = arith.divf %135, %136 : vector<2x128xf32>
    %138 = arith.select %5, %132, %137 : vector<2x128xi1>, vector<2x128xf32>
    %139 = vector.extract_strided_slice %138 {offsets = [0, 0], sizes = [2, 32], strides = [1, 1]} : vector<2x128xf32> to vector<2x32xf32>
    %140 = vector.extract_strided_slice %138 {offsets = [0, 32], sizes = [2, 32], strides = [1, 1]} : vector<2x128xf32> to vector<2x32xf32>
    %141 = vector.extract_strided_slice %138 {offsets = [0, 64], sizes = [2, 32], strides = [1, 1]} : vector<2x128xf32> to vector<2x32xf32>
    %142 = vector.extract_strided_slice %138 {offsets = [0, 96], sizes = [2, 32], strides = [1, 1]} : vector<2x128xf32> to vector<2x32xf32>
    %143 = arith.mulf %140, %126 : vector<2x32xf32>
    %144 = arith.mulf %139, %141 : vector<2x32xf32>
    %145 = arith.addf %143, %144 : vector<2x32xf32>
    %146 = math.tanh %145 : vector<2x32xf32>
    %147 = arith.mulf %142, %146 : vector<2x32xf32>
    %148 = vector.extract_strided_slice %11 {offsets = [14, 0], sizes = [2, 128], strides = [1, 1]} : vector<16x128xf32> to vector<2x128xf32>
    %cst_23 = arith.constant dense<0.000000e+00> : vector<2x128xf32>
    %149 = tpu.matmul %147, %12, %cst_23 {dimension_numbers = #tpu.dot_dimension_numbers<[1], [0], [0], [1], [0, 0, 1, 1], [], []>} : vector<2x32xf32>, vector<32x128xf32>, vector<2x128xf32> -> vector<2x128xf32>
    %150 = arith.addf %148, %149 : vector<2x128xf32>
    %151 = math.tanh %150 : vector<2x128xf32>
    %152 = arith.negf %150 : vector<2x128xf32>
    %153 = math.exp %152 : vector<2x128xf32>
    %cst_24 = arith.constant 1.000000e+00 : f32
    %154 = vector.broadcast %cst_24 : f32 to vector<2x128xf32>
    %155 = arith.addf %154, %153 : vector<2x128xf32>
    %156 = arith.divf %154, %155 : vector<2x128xf32>
    %157 = arith.select %5, %151, %156 : vector<2x128xi1>, vector<2x128xf32>
    %158 = vector.extract_strided_slice %157 {offsets = [0, 0], sizes = [2, 32], strides = [1, 1]} : vector<2x128xf32> to vector<2x32xf32>
    %159 = vector.extract_strided_slice %157 {offsets = [0, 32], sizes = [2, 32], strides = [1, 1]} : vector<2x128xf32> to vector<2x32xf32>
    %160 = vector.extract_strided_slice %157 {offsets = [0, 64], sizes = [2, 32], strides = [1, 1]} : vector<2x128xf32> to vector<2x32xf32>
    %161 = vector.extract_strided_slice %157 {offsets = [0, 96], sizes = [2, 32], strides = [1, 1]} : vector<2x128xf32> to vector<2x32xf32>
    %162 = arith.mulf %159, %145 : vector<2x32xf32>
    %163 = arith.mulf %158, %160 : vector<2x32xf32>
    %164 = arith.addf %162, %163 : vector<2x32xf32>
    %165 = math.tanh %164 : vector<2x32xf32>
    %166 = arith.mulf %161, %165 : vector<2x32xf32>
    %167 = tpu.concatenate %33, %52, %71, %90, %109, %128, %147, %166 in 0 : vector<2x32xf32>, vector<2x32xf32>, vector<2x32xf32>, vector<2x32xf32>, vector<2x32xf32>, vector<2x32xf32>, vector<2x32xf32>, vector<2x32xf32> -> vector<16x32xf32>
    %c0_25 = arith.constant 0 : index
    %c0_26 = arith.constant 0 : index
    %168 = vector.load %arg5[%c0_25, %c0_26] : memref<32x128xf32, #tpu.memory_space<vmem>>, vector<32x128xf32>
    %cst_27 = arith.constant dense<0.000000e+00> : vector<16x128xf32>
    %169 = tpu.matmul %167, %168, %cst_27 {dimension_numbers = #tpu.dot_dimension_numbers<[1], [0], [0], [1], [0, 0, 1, 1], [], []>} : vector<16x32xf32>, vector<32x128xf32>, vector<16x128xf32> -> vector<16x128xf32>
    %c0_28 = arith.constant 0 : index
    %c0_29 = arith.constant 0 : index
    %170 = vector.load %arg7[%c0_28, %c0_29] : memref<1x128xf32, #tpu.memory_space<vmem>>, vector<1x128xf32>
    %171 = vector.broadcast %170 : vector<1x128xf32> to vector<16x128xf32>
    %172 = arith.addf %169, %171 : vector<16x128xf32>
    %c0_30 = arith.constant 0 : index
    %c0_31 = arith.constant 0 : index
    %173 = vector.load %arg6[%c0_30, %c0_31] : memref<32x128xf32, #tpu.memory_space<vmem>>, vector<32x128xf32>
    %cst_32 = arith.constant 0.000000e+00 : f32
    %174 = vector.broadcast %cst_32 : f32 to vector<2x32xf32>
    %cst_33 = arith.constant 0.000000e+00 : f32
    %175 = vector.broadcast %cst_33 : f32 to vector<2x32xf32>
    %176 = vector.extract_strided_slice %172 {offsets = [0, 0], sizes = [2, 128], strides = [1, 1]} : vector<16x128xf32> to vector<2x128xf32>
    %cst_34 = arith.constant dense<0.000000e+00> : vector<2x128xf32>
    %177 = tpu.matmul %174, %173, %cst_34 {dimension_numbers = #tpu.dot_dimension_numbers<[1], [0], [0], [1], [0, 0, 1, 1], [], []>} : vector<2x32xf32>, vector<32x128xf32>, vector<2x128xf32> -> vector<2x128xf32>
    %178 = arith.addf %176, %177 : vector<2x128xf32>
    %179 = math.tanh %178 : vector<2x128xf32>
    %180 = arith.negf %178 : vector<2x128xf32>
    %181 = math.exp %180 : vector<2x128xf32>
    %cst_35 = arith.constant 1.000000e+00 : f32
    %182 = vector.broadcast %cst_35 : f32 to vector<2x128xf32>
    %183 = arith.addf %182, %181 : vector<2x128xf32>
    %184 = arith.divf %182, %183 : vector<2x128xf32>
    %185 = arith.select %5, %179, %184 : vector<2x128xi1>, vector<2x128xf32>
    %186 = vector.extract_strided_slice %185 {offsets = [0, 0], sizes = [2, 32], strides = [1, 1]} : vector<2x128xf32> to vector<2x32xf32>
    %187 = vector.extract_strided_slice %185 {offsets = [0, 32], sizes = [2, 32], strides = [1, 1]} : vector<2x128xf32> to vector<2x32xf32>
    %188 = vector.extract_strided_slice %185 {offsets = [0, 64], sizes = [2, 32], strides = [1, 1]} : vector<2x128xf32> to vector<2x32xf32>
    %189 = vector.extract_strided_slice %185 {offsets = [0, 96], sizes = [2, 32], strides = [1, 1]} : vector<2x128xf32> to vector<2x32xf32>
    %190 = arith.mulf %187, %175 : vector<2x32xf32>
    %191 = arith.mulf %186, %188 : vector<2x32xf32>
    %192 = arith.addf %190, %191 : vector<2x32xf32>
    %193 = math.tanh %192 : vector<2x32xf32>
    %194 = arith.mulf %189, %193 : vector<2x32xf32>
    %195 = vector.extract_strided_slice %172 {offsets = [2, 0], sizes = [2, 128], strides = [1, 1]} : vector<16x128xf32> to vector<2x128xf32>
    %cst_36 = arith.constant dense<0.000000e+00> : vector<2x128xf32>
    %196 = tpu.matmul %194, %173, %cst_36 {dimension_numbers = #tpu.dot_dimension_numbers<[1], [0], [0], [1], [0, 0, 1, 1], [], []>} : vector<2x32xf32>, vector<32x128xf32>, vector<2x128xf32> -> vector<2x128xf32>
    %197 = arith.addf %195, %196 : vector<2x128xf32>
    %198 = math.tanh %197 : vector<2x128xf32>
    %199 = arith.negf %197 : vector<2x128xf32>
    %200 = math.exp %199 : vector<2x128xf32>
    %cst_37 = arith.constant 1.000000e+00 : f32
    %201 = vector.broadcast %cst_37 : f32 to vector<2x128xf32>
    %202 = arith.addf %201, %200 : vector<2x128xf32>
    %203 = arith.divf %201, %202 : vector<2x128xf32>
    %204 = arith.select %5, %198, %203 : vector<2x128xi1>, vector<2x128xf32>
    %205 = vector.extract_strided_slice %204 {offsets = [0, 0], sizes = [2, 32], strides = [1, 1]} : vector<2x128xf32> to vector<2x32xf32>
    %206 = vector.extract_strided_slice %204 {offsets = [0, 32], sizes = [2, 32], strides = [1, 1]} : vector<2x128xf32> to vector<2x32xf32>
    %207 = vector.extract_strided_slice %204 {offsets = [0, 64], sizes = [2, 32], strides = [1, 1]} : vector<2x128xf32> to vector<2x32xf32>
    %208 = vector.extract_strided_slice %204 {offsets = [0, 96], sizes = [2, 32], strides = [1, 1]} : vector<2x128xf32> to vector<2x32xf32>
    %209 = arith.mulf %206, %192 : vector<2x32xf32>
    %210 = arith.mulf %205, %207 : vector<2x32xf32>
    %211 = arith.addf %209, %210 : vector<2x32xf32>
    %212 = math.tanh %211 : vector<2x32xf32>
    %213 = arith.mulf %208, %212 : vector<2x32xf32>
    %214 = vector.extract_strided_slice %172 {offsets = [4, 0], sizes = [2, 128], strides = [1, 1]} : vector<16x128xf32> to vector<2x128xf32>
    %cst_38 = arith.constant dense<0.000000e+00> : vector<2x128xf32>
    %215 = tpu.matmul %213, %173, %cst_38 {dimension_numbers = #tpu.dot_dimension_numbers<[1], [0], [0], [1], [0, 0, 1, 1], [], []>} : vector<2x32xf32>, vector<32x128xf32>, vector<2x128xf32> -> vector<2x128xf32>
    %216 = arith.addf %214, %215 : vector<2x128xf32>
    %217 = math.tanh %216 : vector<2x128xf32>
    %218 = arith.negf %216 : vector<2x128xf32>
    %219 = math.exp %218 : vector<2x128xf32>
    %cst_39 = arith.constant 1.000000e+00 : f32
    %220 = vector.broadcast %cst_39 : f32 to vector<2x128xf32>
    %221 = arith.addf %220, %219 : vector<2x128xf32>
    %222 = arith.divf %220, %221 : vector<2x128xf32>
    %223 = arith.select %5, %217, %222 : vector<2x128xi1>, vector<2x128xf32>
    %224 = vector.extract_strided_slice %223 {offsets = [0, 0], sizes = [2, 32], strides = [1, 1]} : vector<2x128xf32> to vector<2x32xf32>
    %225 = vector.extract_strided_slice %223 {offsets = [0, 32], sizes = [2, 32], strides = [1, 1]} : vector<2x128xf32> to vector<2x32xf32>
    %226 = vector.extract_strided_slice %223 {offsets = [0, 64], sizes = [2, 32], strides = [1, 1]} : vector<2x128xf32> to vector<2x32xf32>
    %227 = vector.extract_strided_slice %223 {offsets = [0, 96], sizes = [2, 32], strides = [1, 1]} : vector<2x128xf32> to vector<2x32xf32>
    %228 = arith.mulf %225, %211 : vector<2x32xf32>
    %229 = arith.mulf %224, %226 : vector<2x32xf32>
    %230 = arith.addf %228, %229 : vector<2x32xf32>
    %231 = math.tanh %230 : vector<2x32xf32>
    %232 = arith.mulf %227, %231 : vector<2x32xf32>
    %233 = vector.extract_strided_slice %172 {offsets = [6, 0], sizes = [2, 128], strides = [1, 1]} : vector<16x128xf32> to vector<2x128xf32>
    %cst_40 = arith.constant dense<0.000000e+00> : vector<2x128xf32>
    %234 = tpu.matmul %232, %173, %cst_40 {dimension_numbers = #tpu.dot_dimension_numbers<[1], [0], [0], [1], [0, 0, 1, 1], [], []>} : vector<2x32xf32>, vector<32x128xf32>, vector<2x128xf32> -> vector<2x128xf32>
    %235 = arith.addf %233, %234 : vector<2x128xf32>
    %236 = math.tanh %235 : vector<2x128xf32>
    %237 = arith.negf %235 : vector<2x128xf32>
    %238 = math.exp %237 : vector<2x128xf32>
    %cst_41 = arith.constant 1.000000e+00 : f32
    %239 = vector.broadcast %cst_41 : f32 to vector<2x128xf32>
    %240 = arith.addf %239, %238 : vector<2x128xf32>
    %241 = arith.divf %239, %240 : vector<2x128xf32>
    %242 = arith.select %5, %236, %241 : vector<2x128xi1>, vector<2x128xf32>
    %243 = vector.extract_strided_slice %242 {offsets = [0, 0], sizes = [2, 32], strides = [1, 1]} : vector<2x128xf32> to vector<2x32xf32>
    %244 = vector.extract_strided_slice %242 {offsets = [0, 32], sizes = [2, 32], strides = [1, 1]} : vector<2x128xf32> to vector<2x32xf32>
    %245 = vector.extract_strided_slice %242 {offsets = [0, 64], sizes = [2, 32], strides = [1, 1]} : vector<2x128xf32> to vector<2x32xf32>
    %246 = vector.extract_strided_slice %242 {offsets = [0, 96], sizes = [2, 32], strides = [1, 1]} : vector<2x128xf32> to vector<2x32xf32>
    %247 = arith.mulf %244, %230 : vector<2x32xf32>
    %248 = arith.mulf %243, %245 : vector<2x32xf32>
    %249 = arith.addf %247, %248 : vector<2x32xf32>
    %250 = math.tanh %249 : vector<2x32xf32>
    %251 = arith.mulf %246, %250 : vector<2x32xf32>
    %252 = vector.extract_strided_slice %172 {offsets = [8, 0], sizes = [2, 128], strides = [1, 1]} : vector<16x128xf32> to vector<2x128xf32>
    %cst_42 = arith.constant dense<0.000000e+00> : vector<2x128xf32>
    %253 = tpu.matmul %251, %173, %cst_42 {dimension_numbers = #tpu.dot_dimension_numbers<[1], [0], [0], [1], [0, 0, 1, 1], [], []>} : vector<2x32xf32>, vector<32x128xf32>, vector<2x128xf32> -> vector<2x128xf32>
    %254 = arith.addf %252, %253 : vector<2x128xf32>
    %255 = math.tanh %254 : vector<2x128xf32>
    %256 = arith.negf %254 : vector<2x128xf32>
    %257 = math.exp %256 : vector<2x128xf32>
    %cst_43 = arith.constant 1.000000e+00 : f32
    %258 = vector.broadcast %cst_43 : f32 to vector<2x128xf32>
    %259 = arith.addf %258, %257 : vector<2x128xf32>
    %260 = arith.divf %258, %259 : vector<2x128xf32>
    %261 = arith.select %5, %255, %260 : vector<2x128xi1>, vector<2x128xf32>
    %262 = vector.extract_strided_slice %261 {offsets = [0, 0], sizes = [2, 32], strides = [1, 1]} : vector<2x128xf32> to vector<2x32xf32>
    %263 = vector.extract_strided_slice %261 {offsets = [0, 32], sizes = [2, 32], strides = [1, 1]} : vector<2x128xf32> to vector<2x32xf32>
    %264 = vector.extract_strided_slice %261 {offsets = [0, 64], sizes = [2, 32], strides = [1, 1]} : vector<2x128xf32> to vector<2x32xf32>
    %265 = vector.extract_strided_slice %261 {offsets = [0, 96], sizes = [2, 32], strides = [1, 1]} : vector<2x128xf32> to vector<2x32xf32>
    %266 = arith.mulf %263, %249 : vector<2x32xf32>
    %267 = arith.mulf %262, %264 : vector<2x32xf32>
    %268 = arith.addf %266, %267 : vector<2x32xf32>
    %269 = math.tanh %268 : vector<2x32xf32>
    %270 = arith.mulf %265, %269 : vector<2x32xf32>
    %271 = vector.extract_strided_slice %172 {offsets = [10, 0], sizes = [2, 128], strides = [1, 1]} : vector<16x128xf32> to vector<2x128xf32>
    %cst_44 = arith.constant dense<0.000000e+00> : vector<2x128xf32>
    %272 = tpu.matmul %270, %173, %cst_44 {dimension_numbers = #tpu.dot_dimension_numbers<[1], [0], [0], [1], [0, 0, 1, 1], [], []>} : vector<2x32xf32>, vector<32x128xf32>, vector<2x128xf32> -> vector<2x128xf32>
    %273 = arith.addf %271, %272 : vector<2x128xf32>
    %274 = math.tanh %273 : vector<2x128xf32>
    %275 = arith.negf %273 : vector<2x128xf32>
    %276 = math.exp %275 : vector<2x128xf32>
    %cst_45 = arith.constant 1.000000e+00 : f32
    %277 = vector.broadcast %cst_45 : f32 to vector<2x128xf32>
    %278 = arith.addf %277, %276 : vector<2x128xf32>
    %279 = arith.divf %277, %278 : vector<2x128xf32>
    %280 = arith.select %5, %274, %279 : vector<2x128xi1>, vector<2x128xf32>
    %281 = vector.extract_strided_slice %280 {offsets = [0, 0], sizes = [2, 32], strides = [1, 1]} : vector<2x128xf32> to vector<2x32xf32>
    %282 = vector.extract_strided_slice %280 {offsets = [0, 32], sizes = [2, 32], strides = [1, 1]} : vector<2x128xf32> to vector<2x32xf32>
    %283 = vector.extract_strided_slice %280 {offsets = [0, 64], sizes = [2, 32], strides = [1, 1]} : vector<2x128xf32> to vector<2x32xf32>
    %284 = vector.extract_strided_slice %280 {offsets = [0, 96], sizes = [2, 32], strides = [1, 1]} : vector<2x128xf32> to vector<2x32xf32>
    %285 = arith.mulf %282, %268 : vector<2x32xf32>
    %286 = arith.mulf %281, %283 : vector<2x32xf32>
    %287 = arith.addf %285, %286 : vector<2x32xf32>
    %288 = math.tanh %287 : vector<2x32xf32>
    %289 = arith.mulf %284, %288 : vector<2x32xf32>
    %290 = vector.extract_strided_slice %172 {offsets = [12, 0], sizes = [2, 128], strides = [1, 1]} : vector<16x128xf32> to vector<2x128xf32>
    %cst_46 = arith.constant dense<0.000000e+00> : vector<2x128xf32>
    %291 = tpu.matmul %289, %173, %cst_46 {dimension_numbers = #tpu.dot_dimension_numbers<[1], [0], [0], [1], [0, 0, 1, 1], [], []>} : vector<2x32xf32>, vector<32x128xf32>, vector<2x128xf32> -> vector<2x128xf32>
    %292 = arith.addf %290, %291 : vector<2x128xf32>
    %293 = math.tanh %292 : vector<2x128xf32>
    %294 = arith.negf %292 : vector<2x128xf32>
    %295 = math.exp %294 : vector<2x128xf32>
    %cst_47 = arith.constant 1.000000e+00 : f32
    %296 = vector.broadcast %cst_47 : f32 to vector<2x128xf32>
    %297 = arith.addf %296, %295 : vector<2x128xf32>
    %298 = arith.divf %296, %297 : vector<2x128xf32>
    %299 = arith.select %5, %293, %298 : vector<2x128xi1>, vector<2x128xf32>
    %300 = vector.extract_strided_slice %299 {offsets = [0, 0], sizes = [2, 32], strides = [1, 1]} : vector<2x128xf32> to vector<2x32xf32>
    %301 = vector.extract_strided_slice %299 {offsets = [0, 32], sizes = [2, 32], strides = [1, 1]} : vector<2x128xf32> to vector<2x32xf32>
    %302 = vector.extract_strided_slice %299 {offsets = [0, 64], sizes = [2, 32], strides = [1, 1]} : vector<2x128xf32> to vector<2x32xf32>
    %303 = vector.extract_strided_slice %299 {offsets = [0, 96], sizes = [2, 32], strides = [1, 1]} : vector<2x128xf32> to vector<2x32xf32>
    %304 = arith.mulf %301, %287 : vector<2x32xf32>
    %305 = arith.mulf %300, %302 : vector<2x32xf32>
    %306 = arith.addf %304, %305 : vector<2x32xf32>
    %307 = math.tanh %306 : vector<2x32xf32>
    %308 = arith.mulf %303, %307 : vector<2x32xf32>
    %309 = vector.extract_strided_slice %172 {offsets = [14, 0], sizes = [2, 128], strides = [1, 1]} : vector<16x128xf32> to vector<2x128xf32>
    %cst_48 = arith.constant dense<0.000000e+00> : vector<2x128xf32>
    %310 = tpu.matmul %308, %173, %cst_48 {dimension_numbers = #tpu.dot_dimension_numbers<[1], [0], [0], [1], [0, 0, 1, 1], [], []>} : vector<2x32xf32>, vector<32x128xf32>, vector<2x128xf32> -> vector<2x128xf32>
    %311 = arith.addf %309, %310 : vector<2x128xf32>
    %312 = math.tanh %311 : vector<2x128xf32>
    %313 = arith.negf %311 : vector<2x128xf32>
    %314 = math.exp %313 : vector<2x128xf32>
    %cst_49 = arith.constant 1.000000e+00 : f32
    %315 = vector.broadcast %cst_49 : f32 to vector<2x128xf32>
    %316 = arith.addf %315, %314 : vector<2x128xf32>
    %317 = arith.divf %315, %316 : vector<2x128xf32>
    %318 = arith.select %5, %312, %317 : vector<2x128xi1>, vector<2x128xf32>
    %319 = vector.extract_strided_slice %318 {offsets = [0, 0], sizes = [2, 32], strides = [1, 1]} : vector<2x128xf32> to vector<2x32xf32>
    %320 = vector.extract_strided_slice %318 {offsets = [0, 32], sizes = [2, 32], strides = [1, 1]} : vector<2x128xf32> to vector<2x32xf32>
    %321 = vector.extract_strided_slice %318 {offsets = [0, 64], sizes = [2, 32], strides = [1, 1]} : vector<2x128xf32> to vector<2x32xf32>
    %322 = vector.extract_strided_slice %318 {offsets = [0, 96], sizes = [2, 32], strides = [1, 1]} : vector<2x128xf32> to vector<2x32xf32>
    %323 = arith.mulf %320, %306 : vector<2x32xf32>
    %324 = arith.mulf %319, %321 : vector<2x32xf32>
    %325 = arith.addf %323, %324 : vector<2x32xf32>
    %326 = math.tanh %325 : vector<2x32xf32>
    %327 = arith.mulf %322, %326 : vector<2x32xf32>
    %328 = vector.extract_strided_slice %194 {offsets = [0, 0], sizes = [1, 32], strides = [1, 1]} : vector<2x32xf32> to vector<1x32xf32>
    %329 = vector.extract_strided_slice %194 {offsets = [1, 0], sizes = [1, 32], strides = [1, 1]} : vector<2x32xf32> to vector<1x32xf32>
    %330 = vector.extract_strided_slice %213 {offsets = [0, 0], sizes = [1, 32], strides = [1, 1]} : vector<2x32xf32> to vector<1x32xf32>
    %331 = vector.extract_strided_slice %213 {offsets = [1, 0], sizes = [1, 32], strides = [1, 1]} : vector<2x32xf32> to vector<1x32xf32>
    %332 = vector.extract_strided_slice %232 {offsets = [0, 0], sizes = [1, 32], strides = [1, 1]} : vector<2x32xf32> to vector<1x32xf32>
    %333 = vector.extract_strided_slice %232 {offsets = [1, 0], sizes = [1, 32], strides = [1, 1]} : vector<2x32xf32> to vector<1x32xf32>
    %334 = vector.extract_strided_slice %251 {offsets = [0, 0], sizes = [1, 32], strides = [1, 1]} : vector<2x32xf32> to vector<1x32xf32>
    %335 = vector.extract_strided_slice %251 {offsets = [1, 0], sizes = [1, 32], strides = [1, 1]} : vector<2x32xf32> to vector<1x32xf32>
    %336 = tpu.concatenate %328, %329, %330, %331, %332, %333, %334, %335 in 1 : vector<1x32xf32>, vector<1x32xf32>, vector<1x32xf32>, vector<1x32xf32>, vector<1x32xf32>, vector<1x32xf32>, vector<1x32xf32>, vector<1x32xf32> -> vector<1x256xf32>
    %337 = vector.extract_strided_slice %270 {offsets = [0, 0], sizes = [1, 32], strides = [1, 1]} : vector<2x32xf32> to vector<1x32xf32>
    %338 = vector.extract_strided_slice %270 {offsets = [1, 0], sizes = [1, 32], strides = [1, 1]} : vector<2x32xf32> to vector<1x32xf32>
    %339 = vector.extract_strided_slice %289 {offsets = [0, 0], sizes = [1, 32], strides = [1, 1]} : vector<2x32xf32> to vector<1x32xf32>
    %340 = vector.extract_strided_slice %289 {offsets = [1, 0], sizes = [1, 32], strides = [1, 1]} : vector<2x32xf32> to vector<1x32xf32>
    %341 = vector.extract_strided_slice %308 {offsets = [0, 0], sizes = [1, 32], strides = [1, 1]} : vector<2x32xf32> to vector<1x32xf32>
    %342 = vector.extract_strided_slice %308 {offsets = [1, 0], sizes = [1, 32], strides = [1, 1]} : vector<2x32xf32> to vector<1x32xf32>
    %343 = vector.extract_strided_slice %327 {offsets = [0, 0], sizes = [1, 32], strides = [1, 1]} : vector<2x32xf32> to vector<1x32xf32>
    %344 = vector.extract_strided_slice %327 {offsets = [1, 0], sizes = [1, 32], strides = [1, 1]} : vector<2x32xf32> to vector<1x32xf32>
    %345 = tpu.concatenate %337, %338, %339, %340, %341, %342, %343, %344 in 1 : vector<1x32xf32>, vector<1x32xf32>, vector<1x32xf32>, vector<1x32xf32>, vector<1x32xf32>, vector<1x32xf32>, vector<1x32xf32>, vector<1x32xf32> -> vector<1x256xf32>
    %346 = tpu.concatenate %336, %345 in 0 : vector<1x256xf32>, vector<1x256xf32> -> vector<2x256xf32>
    %c0_50 = arith.constant 0 : index
    %c0_51 = arith.constant 0 : index
    %347 = vector.load %arg8[%c0_50, %c0_51] : memref<256x4xf32, #tpu.memory_space<vmem>>, vector<256x4xf32>
    %cst_52 = arith.constant dense<0.000000e+00> : vector<2x4xf32>
    %348 = tpu.matmul %346, %347, %cst_52 {dimension_numbers = #tpu.dot_dimension_numbers<[1], [0], [0], [1], [0, 0, 1, 1], [], []>} : vector<2x256xf32>, vector<256x4xf32>, vector<2x4xf32> -> vector<2x4xf32>
    %c0_53 = arith.constant 0 : index
    %c0_54 = arith.constant 0 : index
    %349 = vector.load %arg9[%c0_53, %c0_54] : memref<1x4xf32, #tpu.memory_space<vmem>>, vector<1x4xf32>
    %350 = vector.broadcast %349 : vector<1x4xf32> to vector<2x4xf32>
    %351 = arith.addf %348, %350 : vector<2x4xf32>
    %c0_55 = arith.constant 0 : index
    %c0_56 = arith.constant 0 : index
    %352 = vector.load %arg10[%c0_55, %c0_56] : memref<2x4xf32, #tpu.memory_space<vmem>>, vector<2x4xf32>
    tpu.vector_store %arg10[%c0_55, %c0_56], %351 {strides = array<i32>} : memref<2x4xf32, #tpu.memory_space<vmem>>, vector<2x4xf32>,
    return
  }
  func.func @transform_0(%arg0: i32) -> (i32, i32) {
    %c0_i32 = arith.constant 0 : i32
    %c0_i32_0 = arith.constant 0 : i32
    %c0_i32_1 = arith.constant 0 : i32
    return %c0_i32, %c0_i32_0 : i32, i32
  }
  func.func @transform_1(%arg0: i32) -> (i32, i32) {
    %c0_i32 = arith.constant 0 : i32
    %c0_i32_0 = arith.constant 0 : i32
    %c0_i32_1 = arith.constant 0 : i32
    return %c0_i32, %c0_i32_0 : i32, i32
  }
  func.func @transform_2(%arg0: i32) -> (i32, i32) {
    %c0_i32 = arith.constant 0 : i32
    %c0_i32_0 = arith.constant 0 : i32
    %c0_i32_1 = arith.constant 0 : i32
    return %c0_i32, %c0_i32_0 : i32, i32
  }
  func.func @transform_3(%arg0: i32) -> (i32, i32) {
    %c0_i32 = arith.constant 0 : i32
    %c0_i32_0 = arith.constant 0 : i32
    %c0_i32_1 = arith.constant 0 : i32
    return %c0_i32, %c0_i32_0 : i32, i32
  }
  func.func @transform_4(%arg0: i32) -> (i32, i32) {
    %c0_i32 = arith.constant 0 : i32
    %c0_i32_0 = arith.constant 0 : i32
    %c0_i32_1 = arith.constant 0 : i32
    return %c0_i32, %c0_i32_0 : i32, i32
  }
  func.func @transform_5(%arg0: i32) -> (i32, i32) {
    %c0_i32 = arith.constant 0 : i32
    %c0_i32_0 = arith.constant 0 : i32
    %c0_i32_1 = arith.constant 0 : i32
    return %c0_i32, %c0_i32_0 : i32, i32
  }
  func.func @transform_6(%arg0: i32) -> (i32, i32) {
    %c0_i32 = arith.constant 0 : i32
    %c0_i32_0 = arith.constant 0 : i32
    %c0_i32_1 = arith.constant 0 : i32
    return %c0_i32, %c0_i32_0 : i32, i32
  }
  func.func @transform_7(%arg0: i32) -> (i32, i32) {
    %c0_i32 = arith.constant 0 : i32
    %c0_i32_0 = arith.constant 0 : i32
    %c0_i32_1 = arith.constant 0 : i32
    return %c0_i32, %c0_i32_0 : i32, i32
  }
  func.func @transform_8(%arg0: i32) -> (i32, i32) {
    %c0_i32 = arith.constant 0 : i32
    %c0_i32_0 = arith.constant 0 : i32
    %c0_i32_1 = arith.constant 0 : i32
    return %c0_i32, %c0_i32_0 : i32, i32
  }
  func.func @transform_9(%arg0: i32) -> (i32, i32) {
    %c0_i32 = arith.constant 0 : i32
    %c0_i32_0 = arith.constant 0 : i32
    %c0_i32_1 = arith.constant 0 : i32
    return %c0_i32, %c0_i32_0 : i32, i32
  }
}

</mosaic_0001>

<llo_original>
// kernel: lstm_forward.1
$region0: #{lstm_forward.1}
  #allocation0 [shape = 'u32[]', space=smem, size = 0x4, offset = 0x4, fixed_abs, tag = 'smem constant byte address 0x4 - core index']
  #allocation1 [shape = 'u32[144,128]{1,0:T(1,128)}', space=vmem, size = 0x12000, scoped, tag = 'internal scratch']
  %s0 = inlined_call_operand.vmem [shape: f32[16,80], index: 0, kind: input, shape index: {}]
  %s1 = inlined_call_operand.vmem [shape: f32[80,128], index: 1, kind: input, shape index: {}]
  %s2 = inlined_call_operand.vmem [shape: f32[32,128], index: 2, kind: input, shape index: {}]
  %s3 = inlined_call_operand.vmem [shape: f32[1,128], index: 3, kind: input, shape index: {}]
  %s4 = inlined_call_operand.vmem [shape: f32[32,128], index: 4, kind: input, shape index: {}]
  %s5 = inlined_call_operand.vmem [shape: f32[32,128], index: 5, kind: input, shape index: {}]
  %s6 = inlined_call_operand.vmem [shape: f32[1,128], index: 6, kind: input, shape index: {}]
  %s7 = inlined_call_operand.vmem [shape: f32[256,4], index: 7, kind: input, shape index: {}]
  %s8 = inlined_call_operand.vmem [shape: f32[1,4], index: 8, kind: input, shape index: {}]
  %s9 = inlined_call_operand.hbm [shape: f32[2,4], index: 9, kind: output, shape index: {}]
  %s10 = sld [smem:[#allocation0]]
  $region46: #{lstm_forward.1} parent=0
    _
  %s12 = ssub.s32 1, %s10
  %s13 = scalar_select 0, %s12, %s10
  $region1: #{lstm_forward.1} parent=0
    #allocation2 [shape = 'u8[1024]{0}', space=vmem, size = 0x400, scoped, tag = 'output window, operand 0, single buffered']
    #allocation3 [shape = 's32[1]{0}', space=sflag, size = 0x4, scoped, tag = 'scoped memory for lstm_forward.1']
    %14 = vsyncpa [#allocation3], 0
    // Predicated region
    $region2: #{lstm_forward.1} parent=1 // pred_check
      _
    $region3: #{lstm_forward.1} parent=1 // pred_check_branch
      %16 = sbr.rel (0) target = $region5
    $region4: #{lstm_forward.1} parent=1 // pred_region
      _
    $region5: #{lstm_forward.1} parent=1 // pred_fallthru
      _
    // Predicated region
    $region6: #{lstm_forward.1} parent=1 // pred_check
      _
    $region7: #{lstm_forward.1} parent=1 // pred_check_branch
      %18 = sbr.rel (0) target = $region9
    $region8: #{lstm_forward.1} parent=1 // pred_region
      _
    $region9: #{lstm_forward.1} parent=1 // pred_fallthru
      _
    // Predicated region
    $region10: #{lstm_forward.1} parent=1 // pred_check
      _
    $region11: #{lstm_forward.1} parent=1 // pred_check_branch
      %20 = sbr.rel (0) target = $region13
    $region12: #{lstm_forward.1} parent=1 // pred_region
      _
    $region13: #{lstm_forward.1} parent=1 // pred_fallthru
      _
    // Predicated region
    $region14: #{lstm_forward.1} parent=1 // pred_check
      _
    $region15: #{lstm_forward.1} parent=1 // pred_check_branch
      %22 = sbr.rel (0) target = $region17
    $region16: #{lstm_forward.1} parent=1 // pred_region
      _
    $region17: #{lstm_forward.1} parent=1 // pred_fallthru
      _
    // Predicated region
    $region18: #{lstm_forward.1} parent=1 // pred_check
      _
    $region19: #{lstm_forward.1} parent=1 // pred_check_branch
      %24 = sbr.rel (0) target = $region21
    $region20: #{lstm_forward.1} parent=1 // pred_region
      _
    $region21: #{lstm_forward.1} parent=1 // pred_fallthru
      _
    // Predicated region
    $region22: #{lstm_forward.1} parent=1 // pred_check
      _
    $region23: #{lstm_forward.1} parent=1 // pred_check_branch
      %26 = sbr.rel (0) target = $region25
    $region24: #{lstm_forward.1} parent=1 // pred_region
      _
    $region25: #{lstm_forward.1} parent=1 // pred_fallthru
      _
    // Predicated region
    $region26: #{lstm_forward.1} parent=1 // pred_check
      _
    $region27: #{lstm_forward.1} parent=1 // pred_check_branch
      %28 = sbr.rel (0) target = $region29
    $region28: #{lstm_forward.1} parent=1 // pred_region
      _
    $region29: #{lstm_forward.1} parent=1 // pred_fallthru
      _
    // Predicated region
    $region30: #{lstm_forward.1} parent=1 // pred_check
      _
    $region31: #{lstm_forward.1} parent=1 // pred_check_branch
      %30 = sbr.rel (0) target = $region33
    $region32: #{lstm_forward.1} parent=1 // pred_region
      _
    $region33: #{lstm_forward.1} parent=1 // pred_fallthru
      _
    // Predicated region
    $region34: #{lstm_forward.1} parent=1 // pred_check
      _
    $region35: #{lstm_forward.1} parent=1 // pred_check_branch
      %32 = sbr.rel (0) target = $region37
    $region36: #{lstm_forward.1} parent=1 // pred_region
      _
    $region37: #{lstm_forward.1} parent=1 // pred_fallthru
      _
    %v33 = vlaneseq
    %v34 = vand.u32 %v33, 127
    %vm35 = vcmp.ge.s32.totalorder %v34, 64
    %vm36 = vcmp.lt.s32.totalorder %v34, 96
    %vm37 = vmand %vm35, %vm36
    %v38 = vld [vmem:[%s0] sm:$0xff]
    %v39 = vld [vmem:[%s0 + $0x8] sm:$0xff]
    %v40 = vld [vmem:[%s1] sm:$0xff]
    %v41 = vld [vmem:[%s1 + $0x8] sm:$0xff]
    %v42 = vld [vmem:[%s1 + $0x10] sm:$0xff]
    %v43 = vld [vmem:[%s1 + $0x18] sm:$0xff]
    %v44 = vld [vmem:[%s1 + $0x20] sm:$0xff]
    %v45 = vld [vmem:[%s1 + $0x28] sm:$0xff]
    %v46 = vld [vmem:[%s1 + $0x30] sm:$0xff]
    %v47 = vld [vmem:[%s1 + $0x38] sm:$0xff]
    %v48 = vld [vmem:[%s1 + $0x40] sm:$0xff]
    %v49 = vld [vmem:[%s1 + $0x48] sm:$0xff]
    %v50 = vld [vmem:[%s3] sm:$0x1]
    %v52 = vlaneseq
    %v53 = vshrl.u32 %v52, 7
    %v54 = vsub.s32 0, %v53
    %v55 = vrot.slane %v50, %v54
    %vm57 = vcmask 654336
    %v59 = vsel %vm57, %v38, 0
    %v62 = vsel %vm57, %v39, 0
    %64 = vmatprep.subr.mxu0 0.0
    %65 = vmatpush1.msra.mxu0 0.0
    %66 = vmatprep.subr.mxu0 0.0
    %67 = vmatpush1.msra.mxu0 0.0
    %68 = vmatprep.subr.mxu0 0.0
    %69 = vmatpush1.msra.mxu0 0.0
    %70 = vmatprep.subr.mxu0 0.0
    %71 = vmatpush1.msra.mxu0 0.0
    %72 = vmatprep.subr.mxu0 0.0
    %73 = vmatpush1.msra.mxu0 0.0
    %74 = vmatprep.subr.mxu0 0.0
    %75 = vmatpush1.msra.mxu0 0.0
    %76 = vmatprep.subr.mxu0 0.0
    %77 = vmatpush1.msra.mxu0 %v49
    %78 = vmatprep.subr.mxu0 0.0
    %79 = vmatpush1.msra.mxu0 %v48
    %80 = vmatprep.subr.mxu0 0.0
    %81 = vmatpush1.msra.mxu0 %v47
    %82 = vmatprep.subr.mxu0 0.0
    %83 = vmatpush1.msra.mxu0 %v46
    %84 = vmatprep.subr.mxu0 0.0
    %85 = vmatpush1.msra.mxu0 %v45
    %86 = vmatprep.subr.mxu0 0.0
    %87 = vmatpush1.msra.mxu0 %v44
    %88 = vmatprep.subr.mxu0 0.0
    %89 = vmatpush1.msra.mxu0 %v43
    %90 = vmatprep.subr.mxu0 0.0
    %91 = vmatpush1.msra.mxu0 %v42
    %92 = vmatprep.subr.mxu0 0.0
    %93 = vmatpush1.msra.mxu0 %v41
    %94 = vmatprep.subr.mxu0 0.0
    %95 = vmatpush1.msra.mxu0 %v40
    %96 = vmatprep.subr.mxu0 0.0
    %97 = vmatpush2.msra.mxu0 0.0
    %98 = vmatprep.subr.mxu0 0.0
    %99 = vmatpush2.msra.mxu0 0.0
    %100 = vmatprep.subr.mxu0 0.0
    %101 = vmatpush2.msra.mxu0 0.0
    %102 = vmatprep.subr.mxu0 0.0
    %103 = vmatpush2.msra.mxu0 0.0
    %104 = vmatprep.subr.mxu0 0.0
    %105 = vmatpush2.msra.mxu0 0.0
    %106 = vmatprep.subr.mxu0 0.0
    %107 = vmatpush2.msra.mxu0 0.0
    %108 = vmatprep.subr.mxu0 0.0
    %109 = vmatpush2.msra.mxu0 0.0
    %110 = vmatprep.subr.mxu0 0.0
    %111 = vmatpush2.msra.mxu0 0.0
    %112 = vmatprep.subr.mxu0 0.0
    %113 = vmatpush2.msra.mxu0 0.0
    %114 = vmatprep.subr.mxu0 0.0
    %115 = vmatpush2.msra.mxu0 0.0
    %116 = vmatprep.subr.mxu0 0.0
    %117 = vmatpush2.msra.mxu0 0.0
    %118 = vmatprep.subr.mxu0 0.0
    %119 = vmatpush2.msra.mxu0 0.0
    %120 = vmatprep.subr.mxu0 0.0
    %121 = vmatpush2.msra.mxu0 0.0
    %122 = vmatprep.subr.mxu0 0.0
    %123 = vmatpush2.msra.mxu0 0.0
    %124 = vmatprep.subr.mxu0 0.0
    %125 = vmatpush2.msra.mxu0 0.0
    %126 = vmatprep.subr.mxu0 0.0
    %127 = vmatpush2.msra.mxu0 0.0
    %128 = vmatprep.mubr.f32.mxu0 0.0
    %129 = vmatmul.mubr.f32.gmra.mxu0 %v59
    %v130 = vpop.f32.mrf.mxu0
    %v131 = vadd.f32 %v55, %v130
    %v132 = vpop.f32.mrf.mxu0
    %133 = vmatprep.mubr.f32.mxu0 0.0
    %134 = vmatmul.mubr.f32.gmra.mxu0 %v62
    %v135 = vpop.f32.mrf.mxu0
    %v136 = vadd.f32 %v55, %v135
    %v137 = vpop.f32.mrf.mxu0
    %138 = vdwg.mxu0
    %v139 = vld [vmem:[%s2] sm:$0xff]
    %v140 = vld [vmem:[%s2 + $0x8] sm:$0xff]
    %v141 = vld [vmem:[%s2 + $0x10] sm:$0xff]
    %v142 = vld [vmem:[%s2 + $0x18] sm:$0xff]
    %vm143 = vcmask 261120
    %v145 = vsel %vm143, 0.0, 0
    %147 = vmatprep.subr.mxu0 0.0
    %148 = vmatpush1.msra.mxu0 0.0
    %149 = vmatprep.subr.mxu0 0.0
    %150 = vmatpush1.msra.mxu0 0.0
    %151 = vmatprep.subr.mxu0 0.0
    %152 = vmatpush1.msra.mxu0 0.0
    %153 = vmatprep.subr.mxu0 0.0
    %154 = vmatpush1.msra.mxu0 0.0
    %155 = vmatprep.subr.mxu0 0.0
    %156 = vmatpush1.msra.mxu0 0.0
    %157 = vmatprep.subr.mxu0 0.0
    %158 = vmatpush1.msra.mxu0 0.0
    %159 = vmatprep.subr.mxu0 0.0
    %160 = vmatpush1.msra.mxu0 0.0
    %161 = vmatprep.subr.mxu0 0.0
    %162 = vmatpush1.msra.mxu0 0.0
    %163 = vmatprep.subr.mxu0 0.0
    %164 = vmatpush1.msra.mxu0 0.0
    %165 = vmatprep.subr.mxu0 0.0
    %166 = vmatpush1.msra.mxu0 0.0
    %167 = vmatprep.subr.mxu0 0.0
    %168 = vmatpush1.msra.mxu0 0.0
    %169 = vmatprep.subr.mxu0 0.0
    %170 = vmatpush1.msra.mxu0 0.0
    %171 = vmatprep.subr.mxu0 0.0
    %172 = vmatpush1.msra.mxu0 %v142
    %173 = vmatprep.subr.mxu0 0.0
    %174 = vmatpush1.msra.mxu0 %v141
    %175 = vmatprep.subr.mxu0 0.0
    %176 = vmatpush1.msra.mxu0 %v140
    %177 = vmatprep.subr.mxu0 0.0
    %178 = vmatpush1.msra.mxu0 %v139
    %179 = vmatprep.subr.mxu0 0.0
    %180 = vmatpush2.msra.mxu0 0.0
    %181 = vmatprep.subr.mxu0 0.0
    %182 = vmatpush2.msra.mxu0 0.0
    %183 = vmatprep.subr.mxu0 0.0
    %184 = vmatpush2.msra.mxu0 0.0
    %185 = vmatprep.subr.mxu0 0.0
    %186 = vmatpush2.msra.mxu0 0.0
    %187 = vmatprep.subr.mxu0 0.0
    %188 = vmatpush2.msra.mxu0 0.0
    %189 = vmatprep.subr.mxu0 0.0
    %190 = vmatpush2.msra.mxu0 0.0
    %191 = vmatprep.subr.mxu0 0.0
    %192 = vmatpush2.msra.mxu0 0.0
    %193 = vmatprep.subr.mxu0 0.0
    %194 = vmatpush2.msra.mxu0 0.0
    %195 = vmatprep.subr.mxu0 0.0
    %196 = vmatpush2.msra.mxu0 0.0
    %197 = vmatprep.subr.mxu0 0.0
    %198 = vmatpush2.msra.mxu0 0.0
    %199 = vmatprep.subr.mxu0 0.0
    %200 = vmatpush2.msra.mxu0 0.0
    %201 = vmatprep.subr.mxu0 0.0
    %202 = vmatpush2.msra.mxu0 0.0
    %203 = vmatprep.subr.mxu0 0.0
    %204 = vmatpush2.msra.mxu0 0.0
    %205 = vmatprep.subr.mxu0 0.0
    %206 = vmatpush2.msra.mxu0 0.0
    %207 = vmatprep.subr.mxu0 0.0
    %208 = vmatpush2.msra.mxu0 0.0
    %209 = vmatprep.subr.mxu0 0.0
    %210 = vmatpush2.msra.mxu0 0.0
    %211 = vmatprep.mubr.f32.mxu0 0.0
    %212 = vmatmul.mubr.f32.gmra.mxu0 %v145
    %v213 = vpop.f32.mrf.mxu0
    %v214 = vadd.f32 0.0, %v213
    %v215 = vpop.f32.mrf.mxu0
    %216 = vdwg.mxu0
    %v217 = vadd.f32 %v131, %v214
    %v218 = vtanh.pop %v217
    %v219 = vxor.u32 %v217, 2147483648
    %v220 = vmul.f32 %v219, 1.442695
    %v221 = vpow.pop %v220
    %v222 = vadd.f32 %v221, 1.0
    %v223 = vrcp.pop %v222
    %v224 = vmul.f32 1.0, %v223
    %v225 = vsel %vm37, %v218, %v224
    %v226 = vmul.f32 %v225, 0.0
    %228 = vrot.lane.b32.xlu0 %v225, 64
    %v229 = vpop.permute.xlu0 %228
    %v231 = vmul.f32 %v225, %v229
    %233 = vrot.lane.b32.xlu0 %v231, 32
    %v234 = vpop.permute.xlu0 %233
    %v236 = vadd.f32 %v226, %v234
    %v237 = vtanh.pop %v236
    %239 = vrot.lane.b32.xlu0 %v237, 64
    %v240 = vpop.permute.xlu0 %239
    %v242 = vmul.f32 %v225, %v240
    %244 = vrot.lane.b32.xlu0 %v242, 32
    %v245 = vpop.permute.xlu0 %244
    %v246 = vsel %vm143, %v245, 0
    %248 = vmatprep.subr.mxu0 0.0
    %249 = vmatpush1.msra.mxu0 0.0
    %250 = vmatprep.subr.mxu0 0.0
    %251 = vmatpush1.msra.mxu0 0.0
    %252 = vmatprep.subr.mxu0 0.0
    %253 = vmatpush1.msra.mxu0 0.0
    %254 = vmatprep.subr.mxu0 0.0
    %255 = vmatpush1.msra.mxu0 0.0
    %256 = vmatprep.subr.mxu0 0.0
    %257 = vmatpush1.msra.mxu0 0.0
    %258 = vmatprep.subr.mxu0 0.0
    %259 = vmatpush1.msra.mxu0 0.0
    %260 = vmatprep.subr.mxu0 0.0
    %261 = vmatpush1.msra.mxu0 0.0
    %262 = vmatprep.subr.mxu0 0.0
    %263 = vmatpush1.msra.mxu0 0.0
    %264 = vmatprep.subr.mxu0 0.0
    %265 = vmatpush1.msra.mxu0 0.0
    %266 = vmatprep.subr.mxu0 0.0
    %267 = vmatpush1.msra.mxu0 0.0
    %268 = vmatprep.subr.mxu0 0.0
    %269 = vmatpush1.msra.mxu0 0.0
    %270 = vmatprep.subr.mxu0 0.0
    %271 = vmatpush1.msra.mxu0 0.0
    %272 = vmatprep.subr.mxu0 0.0
    %273 = vmatpush1.msra.mxu0 %v142
    %274 = vmatprep.subr.mxu0 0.0
    %275 = vmatpush1.msra.mxu0 %v141
    %276 = vmatprep.subr.mxu0 0.0
    %277 = vmatpush1.msra.mxu0 %v140
    %278 = vmatprep.subr.mxu0 0.0
    %279 = vmatpush1.msra.mxu0 %v139
    %280 = vmatprep.subr.mxu0 0.0
    %281 = vmatpush2.msra.mxu0 0.0
    %282 = vmatprep.subr.mxu0 0.0
    %283 = vmatpush2.msra.mxu0 0.0
    %284 = vmatprep.subr.mxu0 0.0
    %285 = vmatpush2.msra.mxu0 0.0
    %286 = vmatprep.subr.mxu0 0.0
    %287 = vmatpush2.msra.mxu0 0.0
    %288 = vmatprep.subr.mxu0 0.0
    %289 = vmatpush2.msra.mxu0 0.0
    %290 = vmatprep.subr.mxu0 0.0
    %291 = vmatpush2.msra.mxu0 0.0
    %292 = vmatprep.subr.mxu0 0.0
    %293 = vmatpush2.msra.mxu0 0.0
    %294 = vmatprep.subr.mxu0 0.0
    %295 = vmatpush2.msra.mxu0 0.0
    %296 = vmatprep.subr.mxu0 0.0
    %297 = vmatpush2.msra.mxu0 0.0
    %298 = vmatprep.subr.mxu0 0.0
    %299 = vmatpush2.msra.mxu0 0.0
    %300 = vmatprep.subr.mxu0 0.0
    %301 = vmatpush2.msra.mxu0 0.0
    %302 = vmatprep.subr.mxu0 0.0
    %303 = vmatpush2.msra.mxu0 0.0
    %304 = vmatprep.subr.mxu0 0.0
    %305 = vmatpush2.msra.mxu0 0.0
    %306 = vmatprep.subr.mxu0 0.0
    %307 = vmatpush2.msra.mxu0 0.0
    %308 = vmatprep.subr.mxu0 0.0
    %309 = vmatpush2.msra.mxu0 0.0
    %310 = vmatprep.subr.mxu0 0.0
    %311 = vmatpush2.msra.mxu0 0.0
    %312 = vmatprep.mubr.f32.mxu0 0.0
    %313 = vmatmul.mubr.f32.gmra.mxu0 %v246
    %v314 = vpop.f32.mrf.mxu0
    %v315 = vadd.f32 0.0, %v314
    %v316 = vpop.f32.mrf.mxu0
    %317 = vdwg.mxu0
    %v319 = vrot.slane %v315, 6
    %v321 = vadd.f32 %v131, %v319
    %v322 = vtanh.pop %v321
    %v323 = vxor.u32 %v321, 2147483648
    %v324 = vmul.f32 %v323, 1.442695
    %v325 = vpow.pop %v324
    %v326 = vadd.f32 %v325, 1.0
    %v327 = vrcp.pop %v326
    %v328 = vmul.f32 1.0, %v327
    %v329 = vsel %vm37, %v322, %v328
    %v331 = vrot.slane %v236, 6
    %v333 = vmul.f32 %v329, %v331
    %335 = vrot.lane.b32.xlu0 %v329, 64
    %v336 = vpop.permute.xlu0 %335
    %v338 = vmul.f32 %v329, %v336
    %340 = vrot.lane.b32.xlu0 %v338, 32
    %v341 = vpop.permute.xlu0 %340
    %v343 = vadd.f32 %v333, %v341
    %v344 = vtanh.pop %v343
    %346 = vrot.lane.b32.xlu0 %v344, 64
    %v347 = vpop.permute.xlu0 %346
    %v349 = vmul.f32 %v329, %v347
    %v351 = vrot.slane %v349, 2
    %352 = vrot.lane.b32.xlu0 %v351, 32
    %v353 = vpop.permute.xlu0 %352
    %v354 = vsel %vm143, %v353, 0
    %356 = vmatprep.subr.mxu0 0.0
    %357 = vmatpush1.msra.mxu0 0.0
    %358 = vmatprep.subr.mxu0 0.0
    %359 = vmatpush1.msra.mxu0 0.0
    %360 = vmatprep.subr.mxu0 0.0
    %361 = vmatpush1.msra.mxu0 0.0
    %362 = vmatprep.subr.mxu0 0.0
    %363 = vmatpush1.msra.mxu0 0.0
    %364 = vmatprep.subr.mxu0 0.0
    %365 = vmatpush1.msra.mxu0 0.0
    %366 = vmatprep.subr.mxu0 0.0
    %367 = vmatpush1.msra.mxu0 0.0
    %368 = vmatprep.subr.mxu0 0.0
    %369 = vmatpush1.msra.mxu0 0.0
    %370 = vmatprep.subr.mxu0 0.0
    %371 = vmatpush1.msra.mxu0 0.0
    %372 = vmatprep.subr.mxu0 0.0
    %373 = vmatpush1.msra.mxu0 0.0
    %374 = vmatprep.subr.mxu0 0.0
    %375 = vmatpush1.msra.mxu0 0.0
    %376 = vmatprep.subr.mxu0 0.0
    %377 = vmatpush1.msra.mxu0 0.0
    %378 = vmatprep.subr.mxu0 0.0
    %379 = vmatpush1.msra.mxu0 0.0
    %380 = vmatprep.subr.mxu0 0.0
    %381 = vmatpush1.msra.mxu0 %v142
    %382 = vmatprep.subr.mxu0 0.0
    %383 = vmatpush1.msra.mxu0 %v141
    %384 = vmatprep.subr.mxu0 0.0
    %385 = vmatpush1.msra.mxu0 %v140
    %386 = vmatprep.subr.mxu0 0.0
    %387 = vmatpush1.msra.mxu0 %v139
    %388 = vmatprep.subr.mxu0 0.0
    %389 = vmatpush2.msra.mxu0 0.0
    %390 = vmatprep.subr.mxu0 0.0
    %391 = vmatpush2.msra.mxu0 0.0
    %392 = vmatprep.subr.mxu0 0.0
    %393 = vmatpush2.msra.mxu0 0.0
    %394 = vmatprep.subr.mxu0 0.0
    %395 = vmatpush2.msra.mxu0 0.0
    %396 = vmatprep.subr.mxu0 0.0
    %397 = vmatpush2.msra.mxu0 0.0
    %398 = vmatprep.subr.mxu0 0.0
    %399 = vmatpush2.msra.mxu0 0.0
    %400 = vmatprep.subr.mxu0 0.0
    %401 = vmatpush2.msra.mxu0 0.0
    %402 = vmatprep.subr.mxu0 0.0
    %403 = vmatpush2.msra.mxu0 0.0
    %404 = vmatprep.subr.mxu0 0.0
    %405 = vmatpush2.msra.mxu0 0.0
    %406 = vmatprep.subr.mxu0 0.0
    %407 = vmatpush2.msra.mxu0 0.0
    %408 = vmatprep.subr.mxu0 0.0
    %409 = vmatpush2.msra.mxu0 0.0
    %410 = vmatprep.subr.mxu0 0.0
    %411 = vmatpush2.msra.mxu0 0.0
    %412 = vmatprep.subr.mxu0 0.0
    %413 = vmatpush2.msra.mxu0 0.0
    %414 = vmatprep.subr.mxu0 0.0
    %415 = vmatpush2.msra.mxu0 0.0
    %416 = vmatprep.subr.mxu0 0.0
    %417 = vmatpush2.msra.mxu0 0.0
    %418 = vmatprep.subr.mxu0 0.0
    %419 = vmatpush2.msra.mxu0 0.0
    %420 = vmatprep.mubr.f32.mxu0 0.0
    %421 = vmatmul.mubr.f32.gmra.mxu0 %v354
    %v422 = vpop.f32.mrf.mxu0
    %v423 = vadd.f32 0.0, %v422
    %v424 = vpop.f32.mrf.mxu0
    %425 = vdwg.mxu0
    %v427 = vrot.slane %v423, 4
    %v429 = vadd.f32 %v131, %v427
    %v430 = vtanh.pop %v429
    %v431 = vxor.u32 %v429, 2147483648
    %v432 = vmul.f32 %v431, 1.442695
    %v433 = vpow.pop %v432
    %v434 = vadd.f32 %v433, 1.0
    %v435 = vrcp.pop %v434
    %v436 = vmul.f32 1.0, %v435
    %v437 = vsel %vm37, %v430, %v436
    %v439 = vrot.slane %v343, 6
    %v441 = vmul.f32 %v437, %v439
    %443 = vrot.lane.b32.xlu0 %v437, 64
    %v444 = vpop.permute.xlu0 %443
    %v446 = vmul.f32 %v437, %v444
    %448 = vrot.lane.b32.xlu0 %v446, 32
    %v449 = vpop.permute.xlu0 %448
    %v451 = vadd.f32 %v441, %v449
    %v452 = vtanh.pop %v451
    %454 = vrot.lane.b32.xlu0 %v452, 64
    %v455 = vpop.permute.xlu0 %454
    %v457 = vmul.f32 %v437, %v455
    %v459 = vrot.slane %v457, 4
    %460 = vrot.lane.b32.xlu0 %v459, 32
    %v461 = vpop.permute.xlu0 %460
    %v462 = vsel %vm143, %v461, 0
    %464 = vmatprep.subr.mxu0 0.0
    %465 = vmatpush1.msra.mxu0 0.0
    %466 = vmatprep.subr.mxu0 0.0
    %467 = vmatpush1.msra.mxu0 0.0
    %468 = vmatprep.subr.mxu0 0.0
    %469 = vmatpush1.msra.mxu0 0.0
    %470 = vmatprep.subr.mxu0 0.0
    %471 = vmatpush1.msra.mxu0 0.0
    %472 = vmatprep.subr.mxu0 0.0
    %473 = vmatpush1.msra.mxu0 0.0
    %474 = vmatprep.subr.mxu0 0.0
    %475 = vmatpush1.msra.mxu0 0.0
    %476 = vmatprep.subr.mxu0 0.0
    %477 = vmatpush1.msra.mxu0 0.0
    %478 = vmatprep.subr.mxu0 0.0
    %479 = vmatpush1.msra.mxu0 0.0
    %480 = vmatprep.subr.mxu0 0.0
    %481 = vmatpush1.msra.mxu0 0.0
    %482 = vmatprep.subr.mxu0 0.0
    %483 = vmatpush1.msra.mxu0 0.0
    %484 = vmatprep.subr.mxu0 0.0
    %485 = vmatpush1.msra.mxu0 0.0
    %486 = vmatprep.subr.mxu0 0.0
    %487 = vmatpush1.msra.mxu0 0.0
    %488 = vmatprep.subr.mxu0 0.0
    %489 = vmatpush1.msra.mxu0 %v142
    %490 = vmatprep.subr.mxu0 0.0
    %491 = vmatpush1.msra.mxu0 %v141
    %492 = vmatprep.subr.mxu0 0.0
    %493 = vmatpush1.msra.mxu0 %v140
    %494 = vmatprep.subr.mxu0 0.0
    %495 = vmatpush1.msra.mxu0 %v139
    %496 = vmatprep.subr.mxu0 0.0
    %497 = vmatpush2.msra.mxu0 0.0
    %498 = vmatprep.subr.mxu0 0.0
    %499 = vmatpush2.msra.mxu0 0.0
    %500 = vmatprep.subr.mxu0 0.0
    %501 = vmatpush2.msra.mxu0 0.0
    %502 = vmatprep.subr.mxu0 0.0
    %503 = vmatpush2.msra.mxu0 0.0
    %504 = vmatprep.subr.mxu0 0.0
    %505 = vmatpush2.msra.mxu0 0.0
    %506 = vmatprep.subr.mxu0 0.0
    %507 = vmatpush2.msra.mxu0 0.0
    %508 = vmatprep.subr.mxu0 0.0
    %509 = vmatpush2.msra.mxu0 0.0
    %510 = vmatprep.subr.mxu0 0.0
    %511 = vmatpush2.msra.mxu0 0.0
    %512 = vmatprep.subr.mxu0 0.0
    %513 = vmatpush2.msra.mxu0 0.0
    %514 = vmatprep.subr.mxu0 0.0
    %515 = vmatpush2.msra.mxu0 0.0
    %516 = vmatprep.subr.mxu0 0.0
    %517 = vmatpush2.msra.mxu0 0.0
    %518 = vmatprep.subr.mxu0 0.0
    %519 = vmatpush2.msra.mxu0 0.0
    %520 = vmatprep.subr.mxu0 0.0
    %521 = vmatpush2.msra.mxu0 0.0
    %522 = vmatprep.subr.mxu0 0.0
    %523 = vmatpush2.msra.mxu0 0.0
    %524 = vmatprep.subr.mxu0 0.0
    %525 = vmatpush2.msra.mxu0 0.0
    %526 = vmatprep.subr.mxu0 0.0
    %527 = vmatpush2.msra.mxu0 0.0
    %528 = vmatprep.mubr.f32.mxu0 0.0
    %529 = vmatmul.mubr.f32.gmra.mxu0 %v462
    %v530 = vpop.f32.mrf.mxu0
    %v531 = vadd.f32 0.0, %v530
    %v532 = vpop.f32.mrf.mxu0
    %533 = vdwg.mxu0
    %v535 = vrot.slane %v531, 2
    %v537 = vadd.f32 %v131, %v535
    %v538 = vtanh.pop %v537
    %v539 = vxor.u32 %v537, 2147483648
    %v540 = vmul.f32 %v539, 1.442695
    %v541 = vpow.pop %v540
    %v542 = vadd.f32 %v541, 1.0
    %v543 = vrcp.pop %v542
    %v544 = vmul.f32 1.0, %v543
    %v545 = vsel %vm37, %v538, %v544
    %v547 = vrot.slane %v451, 6
    %v549 = vmul.f32 %v545, %v547
    %551 = vrot.lane.b32.xlu0 %v545, 64
    %v552 = vpop.permute.xlu0 %551
    %v554 = vmul.f32 %v545, %v552
    %556 = vrot.lane.b32.xlu0 %v554, 32
    %v557 = vpop.permute.xlu0 %556
    %v559 = vadd.f32 %v549, %v557
    %v560 = vtanh.pop %v559
    %562 = vrot.lane.b32.xlu0 %v560, 64
    %v563 = vpop.permute.xlu0 %562
    %v565 = vmul.f32 %v545, %v563
    %v567 = vrot.slane %v565, 6
    %568 = vrot.lane.b32.xlu0 %v567, 32
    %v569 = vpop.permute.xlu0 %568
    %v570 = vsel %vm143, %v569, 0
    %572 = vmatprep.subr.mxu0 0.0
    %573 = vmatpush1.msra.mxu0 0.0
    %574 = vmatprep.subr.mxu0 0.0
    %575 = vmatpush1.msra.mxu0 0.0
    %576 = vmatprep.subr.mxu0 0.0
    %577 = vmatpush1.msra.mxu0 0.0
    %578 = vmatprep.subr.mxu0 0.0
    %579 = vmatpush1.msra.mxu0 0.0
    %580 = vmatprep.subr.mxu0 0.0
    %581 = vmatpush1.msra.mxu0 0.0
    %582 = vmatprep.subr.mxu0 0.0
    %583 = vmatpush1.msra.mxu0 0.0
    %584 = vmatprep.subr.mxu0 0.0
    %585 = vmatpush1.msra.mxu0 0.0
    %586 = vmatprep.subr.mxu0 0.0
    %587 = vmatpush1.msra.mxu0 0.0
    %588 = vmatprep.subr.mxu0 0.0
    %589 = vmatpush1.msra.mxu0 0.0
    %590 = vmatprep.subr.mxu0 0.0
    %591 = vmatpush1.msra.mxu0 0.0
    %592 = vmatprep.subr.mxu0 0.0
    %593 = vmatpush1.msra.mxu0 0.0
    %594 = vmatprep.subr.mxu0 0.0
    %595 = vmatpush1.msra.mxu0 0.0
    %596 = vmatprep.subr.mxu0 0.0
    %597 = vmatpush1.msra.mxu0 %v142
    %598 = vmatprep.subr.mxu0 0.0
    %599 = vmatpush1.msra.mxu0 %v141
    %600 = vmatprep.subr.mxu0 0.0
    %601 = vmatpush1.msra.mxu0 %v140
    %602 = vmatprep.subr.mxu0 0.0
    %603 = vmatpush1.msra.mxu0 %v139
    %604 = vmatprep.subr.mxu0 0.0
    %605 = vmatpush2.msra.mxu0 0.0
    %606 = vmatprep.subr.mxu0 0.0
    %607 = vmatpush2.msra.mxu0 0.0
    %608 = vmatprep.subr.mxu0 0.0
    %609 = vmatpush2.msra.mxu0 0.0
    %610 = vmatprep.subr.mxu0 0.0
    %611 = vmatpush2.msra.mxu0 0.0
    %612 = vmatprep.subr.mxu0 0.0
    %613 = vmatpush2.msra.mxu0 0.0
    %614 = vmatprep.subr.mxu0 0.0
    %615 = vmatpush2.msra.mxu0 0.0
    %616 = vmatprep.subr.mxu0 0.0
    %617 = vmatpush2.msra.mxu0 0.0
    %618 = vmatprep.subr.mxu0 0.0
    %619 = vmatpush2.msra.mxu0 0.0
    %620 = vmatprep.subr.mxu0 0.0
    %621 = vmatpush2.msra.mxu0 0.0
    %622 = vmatprep.subr.mxu0 0.0
    %623 = vmatpush2.msra.mxu0 0.0
    %624 = vmatprep.subr.mxu0 0.0
    %625 = vmatpush2.msra.mxu0 0.0
    %626 = vmatprep.subr.mxu0 0.0
    %627 = vmatpush2.msra.mxu0 0.0
    %628 = vmatprep.subr.mxu0 0.0
    %629 = vmatpush2.msra.mxu0 0.0
    %630 = vmatprep.subr.mxu0 0.0
    %631 = vmatpush2.msra.mxu0 0.0
    %632 = vmatprep.subr.mxu0 0.0
    %633 = vmatpush2.msra.mxu0 0.0
    %634 = vmatprep.subr.mxu0 0.0
    %635 = vmatpush2.msra.mxu0 0.0
    %636 = vmatprep.mubr.f32.mxu0 0.0
    %637 = vmatmul.mubr.f32.gmra.mxu0 %v570
    %v638 = vpop.f32.mrf.mxu0
    %v639 = vadd.f32 0.0, %v638
    %v640 = vpop.f32.mrf.mxu0
    %641 = vdwg.mxu0
    %v642 = vadd.f32 %v136, %v639
    %v643 = vtanh.pop %v642
    %v644 = vxor.u32 %v642, 2147483648
    %v645 = vmul.f32 %v644, 1.442695
    %v646 = vpow.pop %v645
    %v647 = vadd.f32 %v646, 1.0
    %v648 = vrcp.pop %v647
    %v649 = vmul.f32 1.0, %v648
    %v650 = vsel %vm37, %v643, %v649
    %v652 = vrot.slane %v559, 6
    %v654 = vmul.f32 %v650, %v652
    %656 = vrot.lane.b32.xlu0 %v650, 64
    %v657 = vpop.permute.xlu0 %656
    %v659 = vmul.f32 %v650, %v657
    %661 = vrot.lane.b32.xlu0 %v659, 32
    %v662 = vpop.permute.xlu0 %661
    %v664 = vadd.f32 %v654, %v662
    %v665 = vtanh.pop %v664
    %667 = vrot.lane.b32.xlu0 %v665, 64
    %v668 = vpop.permute.xlu0 %667
    %v670 = vmul.f32 %v650, %v668
    %672 = vrot.lane.b32.xlu0 %v670, 32
    %v673 = vpop.permute.xlu0 %672
    %v674 = vsel %vm143, %v673, 0
    %676 = vmatprep.subr.mxu0 0.0
    %677 = vmatpush1.msra.mxu0 0.0
    %678 = vmatprep.subr.mxu0 0.0
    %679 = vmatpush1.msra.mxu0 0.0
    %680 = vmatprep.subr.mxu0 0.0
    %681 = vmatpush1.msra.mxu0 0.0
    %682 = vmatprep.subr.mxu0 0.0
    %683 = vmatpush1.msra.mxu0 0.0
    %684 = vmatprep.subr.mxu0 0.0
    %685 = vmatpush1.msra.mxu0 0.0
    %686 = vmatprep.subr.mxu0 0.0
    %687 = vmatpush1.msra.mxu0 0.0
    %688 = vmatprep.subr.mxu0 0.0
    %689 = vmatpush1.msra.mxu0 0.0
    %690 = vmatprep.subr.mxu0 0.0
    %691 = vmatpush1.msra.mxu0 0.0
    %692 = vmatprep.subr.mxu0 0.0
    %693 = vmatpush1.msra.mxu0 0.0
    %694 = vmatprep.subr.mxu0 0.0
    %695 = vmatpush1.msra.mxu0 0.0
    %696 = vmatprep.subr.mxu0 0.0
    %697 = vmatpush1.msra.mxu0 0.0
    %698 = vmatprep.subr.mxu0 0.0
    %699 = vmatpush1.msra.mxu0 0.0
    %700 = vmatprep.subr.mxu0 0.0
    %701 = vmatpush1.msra.mxu0 %v142
    %702 = vmatprep.subr.mxu0 0.0
    %703 = vmatpush1.msra.mxu0 %v141
    %704 = vmatprep.subr.mxu0 0.0
    %705 = vmatpush1.msra.mxu0 %v140
    %706 = vmatprep.subr.mxu0 0.0
    %707 = vmatpush1.msra.mxu0 %v139
    %708 = vmatprep.subr.mxu0 0.0
    %709 = vmatpush2.msra.mxu0 0.0
    %710 = vmatprep.subr.mxu0 0.0
    %711 = vmatpush2.msra.mxu0 0.0
    %712 = vmatprep.subr.mxu0 0.0
    %713 = vmatpush2.msra.mxu0 0.0
    %714 = vmatprep.subr.mxu0 0.0
    %715 = vmatpush2.msra.mxu0 0.0
    %716 = vmatprep.subr.mxu0 0.0
    %717 = vmatpush2.msra.mxu0 0.0
    %718 = vmatprep.subr.mxu0 0.0
    %719 = vmatpush2.msra.mxu0 0.0
    %720 = vmatprep.subr.mxu0 0.0
    %721 = vmatpush2.msra.mxu0 0.0
    %722 = vmatprep.subr.mxu0 0.0
    %723 = vmatpush2.msra.mxu0 0.0
    %724 = vmatprep.subr.mxu0 0.0
    %725 = vmatpush2.msra.mxu0 0.0
    %726 = vmatprep.subr.mxu0 0.0
    %727 = vmatpush2.msra.mxu0 0.0
    %728 = vmatprep.subr.mxu0 0.0
    %729 = vmatpush2.msra.mxu0 0.0
    %730 = vmatprep.subr.mxu0 0.0
    %731 = vmatpush2.msra.mxu0 0.0
    %732 = vmatprep.subr.mxu0 0.0
    %733 = vmatpush2.msra.mxu0 0.0
    %734 = vmatprep.subr.mxu0 0.0
    %735 = vmatpush2.msra.mxu0 0.0
    %736 = vmatprep.subr.mxu0 0.0
    %737 = vmatpush2.msra.mxu0 0.0
    %738 = vmatprep.subr.mxu0 0.0
    %739 = vmatpush2.msra.mxu0 0.0
    %740 = vmatprep.mubr.f32.mxu0 0.0
    %741 = vmatmul.mubr.f32.gmra.mxu0 %v674
    %v742 = vpop.f32.mrf.mxu0
    %v743 = vadd.f32 0.0, %v742
    %v744 = vpop.f32.mrf.mxu0
    %745 = vdwg.mxu0
    %v747 = vrot.slane %v743, 6
    %v749 = vadd.f32 %v136, %v747
    %v750 = vtanh.pop %v749
    %v751 = vxor.u32 %v749, 2147483648
    %v752 = vmul.f32 %v751, 1.442695
    %v753 = vpow.pop %v752
    %v754 = vadd.f32 %v753, 1.0
    %v755 = vrcp.pop %v754
    %v756 = vmul.f32 1.0, %v755
    %v757 = vsel %vm37, %v750, %v756
    %v759 = vrot.slane %v664, 6
    %v761 = vmul.f32 %v757, %v759
    %763 = vrot.lane.b32.xlu0 %v757, 64
    %v764 = vpop.permute.xlu0 %763
    %v766 = vmul.f32 %v757, %v764
    %768 = vrot.lane.b32.xlu0 %v766, 32
    %v769 = vpop.permute.xlu0 %768
    %v771 = vadd.f32 %v761, %v769
    %v772 = vtanh.pop %v771
    %774 = vrot.lane.b32.xlu0 %v772, 64
    %v775 = vpop.permute.xlu0 %774
    %v777 = vmul.f32 %v757, %v775
    %v779 = vrot.slane %v777, 2
    %780 = vrot.lane.b32.xlu0 %v779, 32
    %v781 = vpop.permute.xlu0 %780
    %v782 = vsel %vm143, %v781, 0
    %784 = vmatprep.subr.mxu0 0.0
    %785 = vmatpush1.msra.mxu0 0.0
    %786 = vmatprep.subr.mxu0 0.0
    %787 = vmatpush1.msra.mxu0 0.0
    %788 = vmatprep.subr.mxu0 0.0
    %789 = vmatpush1.msra.mxu0 0.0
    %790 = vmatprep.subr.mxu0 0.0
    %791 = vmatpush1.msra.mxu0 0.0
    %792 = vmatprep.subr.mxu0 0.0
    %793 = vmatpush1.msra.mxu0 0.0
    %794 = vmatprep.subr.mxu0 0.0
    %795 = vmatpush1.msra.mxu0 0.0
    %796 = vmatprep.subr.mxu0 0.0
    %797 = vmatpush1.msra.mxu0 0.0
    %798 = vmatprep.subr.mxu0 0.0
    %799 = vmatpush1.msra.mxu0 0.0
    %800 = vmatprep.subr.mxu0 0.0
    %801 = vmatpush1.msra.mxu0 0.0
    %802 = vmatprep.subr.mxu0 0.0
    %803 = vmatpush1.msra.mxu0 0.0
    %804 = vmatprep.subr.mxu0 0.0
    %805 = vmatpush1.msra.mxu0 0.0
    %806 = vmatprep.subr.mxu0 0.0
    %807 = vmatpush1.msra.mxu0 0.0
    %808 = vmatprep.subr.mxu0 0.0
    %809 = vmatpush1.msra.mxu0 %v142
    %810 = vmatprep.subr.mxu0 0.0
    %811 = vmatpush1.msra.mxu0 %v141
    %812 = vmatprep.subr.mxu0 0.0
    %813 = vmatpush1.msra.mxu0 %v140
    %814 = vmatprep.subr.mxu0 0.0
    %815 = vmatpush1.msra.mxu0 %v139
    %816 = vmatprep.subr.mxu0 0.0
    %817 = vmatpush2.msra.mxu0 0.0
    %818 = vmatprep.subr.mxu0 0.0
    %819 = vmatpush2.msra.mxu0 0.0
    %820 = vmatprep.subr.mxu0 0.0
    %821 = vmatpush2.msra.mxu0 0.0
    %822 = vmatprep.subr.mxu0 0.0
    %823 = vmatpush2.msra.mxu0 0.0
    %824 = vmatprep.subr.mxu0 0.0
    %825 = vmatpush2.msra.mxu0 0.0
    %826 = vmatprep.subr.mxu0 0.0
    %827 = vmatpush2.msra.mxu0 0.0
    %828 = vmatprep.subr.mxu0 0.0
    %829 = vmatpush2.msra.mxu0 0.0
    %830 = vmatprep.subr.mxu0 0.0
    %831 = vmatpush2.msra.mxu0 0.0
    %832 = vmatprep.subr.mxu0 0.0
    %833 = vmatpush2.msra.mxu0 0.0
    %834 = vmatprep.subr.mxu0 0.0
    %835 = vmatpush2.msra.mxu0 0.0
    %836 = vmatprep.subr.mxu0 0.0
    %837 = vmatpush2.msra.mxu0 0.0
    %838 = vmatprep.subr.mxu0 0.0
    %839 = vmatpush2.msra.mxu0 0.0
    %840 = vmatprep.subr.mxu0 0.0
    %841 = vmatpush2.msra.mxu0 0.0
    %842 = vmatprep.subr.mxu0 0.0
    %843 = vmatpush2.msra.mxu0 0.0
    %844 = vmatprep.subr.mxu0 0.0
    %845 = vmatpush2.msra.mxu0 0.0
    %846 = vmatprep.subr.mxu0 0.0
    %847 = vmatpush2.msra.mxu0 0.0
    %848 = vmatprep.mubr.f32.mxu0 0.0
    %849 = vmatmul.mubr.f32.gmra.mxu0 %v782
    %v850 = vpop.f32.mrf.mxu0
    %v851 = vadd.f32 0.0, %v850
    %v852 = vpop.f32.mrf.mxu0
    %853 = vdwg.mxu0
    %v855 = vrot.slane %v851, 4
    %v857 = vadd.f32 %v136, %v855
    %v858 = vtanh.pop %v857
    %v859 = vxor.u32 %v857, 2147483648
    %v860 = vmul.f32 %v859, 1.442695
    %v861 = vpow.pop %v860
    %v862 = vadd.f32 %v861, 1.0
    %v863 = vrcp.pop %v862
    %v864 = vmul.f32 1.0, %v863
    %v865 = vsel %vm37, %v858, %v864
    %v867 = vrot.slane %v771, 6
    %v869 = vmul.f32 %v865, %v867
    %871 = vrot.lane.b32.xlu0 %v865, 64
    %v872 = vpop.permute.xlu0 %871
    %v874 = vmul.f32 %v865, %v872
    %876 = vrot.lane.b32.xlu0 %v874, 32
    %v877 = vpop.permute.xlu0 %876
    %v879 = vadd.f32 %v869, %v877
    %v880 = vtanh.pop %v879
    %882 = vrot.lane.b32.xlu0 %v880, 64
    %v883 = vpop.permute.xlu0 %882
    %v885 = vmul.f32 %v865, %v883
    %v887 = vrot.slane %v885, 4
    %888 = vrot.lane.b32.xlu0 %v887, 32
    %v889 = vpop.permute.xlu0 %888
    %v890 = vsel %vm143, %v889, 0
    %892 = vmatprep.subr.mxu0 0.0
    %893 = vmatpush1.msra.mxu0 0.0
    %894 = vmatprep.subr.mxu0 0.0
    %895 = vmatpush1.msra.mxu0 0.0
    %896 = vmatprep.subr.mxu0 0.0
    %897 = vmatpush1.msra.mxu0 0.0
    %898 = vmatprep.subr.mxu0 0.0
    %899 = vmatpush1.msra.mxu0 0.0
    %900 = vmatprep.subr.mxu0 0.0
    %901 = vmatpush1.msra.mxu0 0.0
    %902 = vmatprep.subr.mxu0 0.0
    %903 = vmatpush1.msra.mxu0 0.0
    %904 = vmatprep.subr.mxu0 0.0
    %905 = vmatpush1.msra.mxu0 0.0
    %906 = vmatprep.subr.mxu0 0.0
    %907 = vmatpush1.msra.mxu0 0.0
    %908 = vmatprep.subr.mxu0 0.0
    %909 = vmatpush1.msra.mxu0 0.0
    %910 = vmatprep.subr.mxu0 0.0
    %911 = vmatpush1.msra.mxu0 0.0
    %912 = vmatprep.subr.mxu0 0.0
    %913 = vmatpush1.msra.mxu0 0.0
    %914 = vmatprep.subr.mxu0 0.0
    %915 = vmatpush1.msra.mxu0 0.0
    %916 = vmatprep.subr.mxu0 0.0
    %917 = vmatpush1.msra.mxu0 %v142
    %918 = vmatprep.subr.mxu0 0.0
    %919 = vmatpush1.msra.mxu0 %v141
    %920 = vmatprep.subr.mxu0 0.0
    %921 = vmatpush1.msra.mxu0 %v140
    %922 = vmatprep.subr.mxu0 0.0
    %923 = vmatpush1.msra.mxu0 %v139
    %924 = vmatprep.subr.mxu0 0.0
    %925 = vmatpush2.msra.mxu0 0.0
    %926 = vmatprep.subr.mxu0 0.0
    %927 = vmatpush2.msra.mxu0 0.0
    %928 = vmatprep.subr.mxu0 0.0
    %929 = vmatpush2.msra.mxu0 0.0
    %930 = vmatprep.subr.mxu0 0.0
    %931 = vmatpush2.msra.mxu0 0.0
    %932 = vmatprep.subr.mxu0 0.0
    %933 = vmatpush2.msra.mxu0 0.0
    %934 = vmatprep.subr.mxu0 0.0
    %935 = vmatpush2.msra.mxu0 0.0
    %936 = vmatprep.subr.mxu0 0.0
    %937 = vmatpush2.msra.mxu0 0.0
    %938 = vmatprep.subr.mxu0 0.0
    %939 = vmatpush2.msra.mxu0 0.0
    %940 = vmatprep.subr.mxu0 0.0
    %941 = vmatpush2.msra.mxu0 0.0
    %942 = vmatprep.subr.mxu0 0.0
    %943 = vmatpush2.msra.mxu0 0.0
    %944 = vmatprep.subr.mxu0 0.0
    %945 = vmatpush2.msra.mxu0 0.0
    %946 = vmatprep.subr.mxu0 0.0
    %947 = vmatpush2.msra.mxu0 0.0
    %948 = vmatprep.subr.mxu0 0.0
    %949 = vmatpush2.msra.mxu0 0.0
    %950 = vmatprep.subr.mxu0 0.0
    %951 = vmatpush2.msra.mxu0 0.0
    %952 = vmatprep.subr.mxu0 0.0
    %953 = vmatpush2.msra.mxu0 0.0
    %954 = vmatprep.subr.mxu0 0.0
    %955 = vmatpush2.msra.mxu0 0.0
    %956 = vmatprep.mubr.f32.mxu0 0.0
    %957 = vmatmul.mubr.f32.gmra.mxu0 %v890
    %v958 = vpop.f32.mrf.mxu0
    %v959 = vadd.f32 0.0, %v958
    %v960 = vpop.f32.mrf.mxu0
    %961 = vdwg.mxu0
    %v963 = vrot.slane %v959, 2
    %v965 = vadd.f32 %v136, %v963
    %v966 = vtanh.pop %v965
    %v967 = vxor.u32 %v965, 2147483648
    %v968 = vmul.f32 %v967, 1.442695
    %v969 = vpow.pop %v968
    %v970 = vadd.f32 %v969, 1.0
    %v971 = vrcp.pop %v970
    %v972 = vmul.f32 1.0, %v971
    %v973 = vsel %vm37, %v966, %v972
    %v975 = vrot.slane %v879, 6
    %v977 = vmul.f32 %v973, %v975
    %979 = vrot.lane.b32.xlu0 %v973, 64
    %v980 = vpop.permute.xlu0 %979
    %v982 = vmul.f32 %v973, %v980
    %984 = vrot.lane.b32.xlu0 %v982, 32
    %v985 = vpop.permute.xlu0 %984
    %v987 = vadd.f32 %v977, %v985
    %v988 = vtanh.pop %v987
    %990 = vrot.lane.b32.xlu0 %v988, 64
    %v991 = vpop.permute.xlu0 %990
    %v993 = vmul.f32 %v973, %v991
    %vm994 = vcmask 1041408
    %v995 = vsel %vm994, %v242, %v349
    %vm996 = vcmask 1043456
    %v997 = vsel %vm996, %v995, %v457
    %vm998 = vcmask 1045504
    %v999 = vsel %vm998, %v997, %v565
    %v1000 = vsel %vm994, %v670, %v777
    %v1001 = vsel %vm996, %v1000, %v885
    %v1002 = vsel %vm998, %v1001, %v993
    %v1003 = vld [vmem:[%s4] sm:$0xff]
    %v1004 = vld [vmem:[%s4 + $0x8] sm:$0xff]
    %v1005 = vld [vmem:[%s4 + $0x10] sm:$0xff]
    %v1006 = vld [vmem:[%s4 + $0x18] sm:$0xff]
    %v1007 = vld [vmem:[%s6] sm:$0x1]
    %v1009 = vlaneseq
    %v1010 = vshrl.u32 %v1009, 7
    %v1011 = vsub.s32 0, %v1010
    %v1012 = vrot.slane %v1007, %v1011
    %1016 = vrot.lane.b32.xlu0 %v999, 32
    %v1017 = vpop.permute.xlu0 %1016
    %1018 = vrot.lane.b32.xlu0 %v1002, 32
    %v1019 = vpop.permute.xlu0 %1018
    %v1020 = vsel %vm143, %v1017, 0
    %v1022 = vsel %vm143, %v1019, 0
    %1024 = vmatprep.subr.mxu0 0.0
    %1025 = vmatpush1.msra.mxu0 0.0
    %1026 = vmatprep.subr.mxu0 0.0
    %1027 = vmatpush1.msra.mxu0 0.0
    %1028 = vmatprep.subr.mxu0 0.0
    %1029 = vmatpush1.msra.mxu0 0.0
    %1030 = vmatprep.subr.mxu0 0.0
    %1031 = vmatpush1.msra.mxu0 0.0
    %1032 = vmatprep.subr.mxu0 0.0
    %1033 = vmatpush1.msra.mxu0 0.0
    %1034 = vmatprep.subr.mxu0 0.0
    %1035 = vmatpush1.msra.mxu0 0.0
    %1036 = vmatprep.subr.mxu0 0.0
    %1037 = vmatpush1.msra.mxu0 0.0
    %1038 = vmatprep.subr.mxu0 0.0
    %1039 = vmatpush1.msra.mxu0 0.0
    %1040 = vmatprep.subr.mxu0 0.0
    %1041 = vmatpush1.msra.mxu0 0.0
    %1042 = vmatprep.subr.mxu0 0.0
    %1043 = vmatpush1.msra.mxu0 0.0
    %1044 = vmatprep.subr.mxu0 0.0
    %1045 = vmatpush1.msra.mxu0 0.0
    %1046 = vmatprep.subr.mxu0 0.0
    %1047 = vmatpush1.msra.mxu0 0.0
    %1048 = vmatprep.subr.mxu0 0.0
    %1049 = vmatpush1.msra.mxu0 %v1006
    %1050 = vmatprep.subr.mxu0 0.0
    %1051 = vmatpush1.msra.mxu0 %v1005
    %1052 = vmatprep.subr.mxu0 0.0
    %1053 = vmatpush1.msra.mxu0 %v1004
    %1054 = vmatprep.subr.mxu0 0.0
    %1055 = vmatpush1.msra.mxu0 %v1003
    %1056 = vmatprep.subr.mxu0 0.0
    %1057 = vmatpush2.msra.mxu0 0.0
    %1058 = vmatprep.subr.mxu0 0.0
    %1059 = vmatpush2.msra.mxu0 0.0
    %1060 = vmatprep.subr.mxu0 0.0
    %1061 = vmatpush2.msra.mxu0 0.0
    %1062 = vmatprep.subr.mxu0 0.0
    %1063 = vmatpush2.msra.mxu0 0.0
    %1064 = vmatprep.subr.mxu0 0.0
    %1065 = vmatpush2.msra.mxu0 0.0
    %1066 = vmatprep.subr.mxu0 0.0
    %1067 = vmatpush2.msra.mxu0 0.0
    %1068 = vmatprep.subr.mxu0 0.0
    %1069 = vmatpush2.msra.mxu0 0.0
    %1070 = vmatprep.subr.mxu0 0.0
    %1071 = vmatpush2.msra.mxu0 0.0
    %1072 = vmatprep.subr.mxu0 0.0
    %1073 = vmatpush2.msra.mxu0 0.0
    %1074 = vmatprep.subr.mxu0 0.0
    %1075 = vmatpush2.msra.mxu0 0.0
    %1076 = vmatprep.subr.mxu0 0.0
    %1077 = vmatpush2.msra.mxu0 0.0
    %1078 = vmatprep.subr.mxu0 0.0
    %1079 = vmatpush2.msra.mxu0 0.0
    %1080 = vmatprep.subr.mxu0 0.0
    %1081 = vmatpush2.msra.mxu0 0.0
    %1082 = vmatprep.subr.mxu0 0.0
    %1083 = vmatpush2.msra.mxu0 0.0
    %1084 = vmatprep.subr.mxu0 0.0
    %1085 = vmatpush2.msra.mxu0 0.0
    %1086 = vmatprep.subr.mxu0 0.0
    %1087 = vmatpush2.msra.mxu0 0.0
    %1088 = vmatprep.mubr.f32.mxu0 0.0
    %1089 = vmatmul.mubr.f32.gmra.mxu0 %v1020
    %v1090 = vpop.f32.mrf.mxu0
    %v1091 = vadd.f32 %v1012, %v1090
    %v1092 = vpop.f32.mrf.mxu0
    %1093 = vmatprep.mubr.f32.mxu0 0.0
    %1094 = vmatmul.mubr.f32.gmra.mxu0 %v1022
    %v1095 = vpop.f32.mrf.mxu0
    %v1096 = vadd.f32 %v1012, %v1095
    %v1097 = vpop.f32.mrf.mxu0
    %1098 = vdwg.mxu0
    %v1099 = vld [vmem:[%s5] sm:$0xff]
    %v1100 = vld [vmem:[%s5 + $0x8] sm:$0xff]
    %v1101 = vld [vmem:[%s5 + $0x10] sm:$0xff]
    %v1102 = vld [vmem:[%s5 + $0x18] sm:$0xff]
    %1103 = vmatprep.subr.mxu0 0.0
    %1104 = vmatpush1.msra.mxu0 0.0
    %1105 = vmatprep.subr.mxu0 0.0
    %1106 = vmatpush1.msra.mxu0 0.0
    %1107 = vmatprep.subr.mxu0 0.0
    %1108 = vmatpush1.msra.mxu0 0.0
    %1109 = vmatprep.subr.mxu0 0.0
    %1110 = vmatpush1.msra.mxu0 0.0
    %1111 = vmatprep.subr.mxu0 0.0
    %1112 = vmatpush1.msra.mxu0 0.0
    %1113 = vmatprep.subr.mxu0 0.0
    %1114 = vmatpush1.msra.mxu0 0.0
    %1115 = vmatprep.subr.mxu0 0.0
    %1116 = vmatpush1.msra.mxu0 0.0
    %1117 = vmatprep.subr.mxu0 0.0
    %1118 = vmatpush1.msra.mxu0 0.0
    %1119 = vmatprep.subr.mxu0 0.0
    %1120 = vmatpush1.msra.mxu0 0.0
    %1121 = vmatprep.subr.mxu0 0.0
    %1122 = vmatpush1.msra.mxu0 0.0
    %1123 = vmatprep.subr.mxu0 0.0
    %1124 = vmatpush1.msra.mxu0 0.0
    %1125 = vmatprep.subr.mxu0 0.0
    %1126 = vmatpush1.msra.mxu0 0.0
    %1127 = vmatprep.subr.mxu0 0.0
    %1128 = vmatpush1.msra.mxu0 %v1102
    %1129 = vmatprep.subr.mxu0 0.0
    %1130 = vmatpush1.msra.mxu0 %v1101
    %1131 = vmatprep.subr.mxu0 0.0
    %1132 = vmatpush1.msra.mxu0 %v1100
    %1133 = vmatprep.subr.mxu0 0.0
    %1134 = vmatpush1.msra.mxu0 %v1099
    %1135 = vmatprep.subr.mxu0 0.0
    %1136 = vmatpush2.msra.mxu0 0.0
    %1137 = vmatprep.subr.mxu0 0.0
    %1138 = vmatpush2.msra.mxu0 0.0
    %1139 = vmatprep.subr.mxu0 0.0
    %1140 = vmatpush2.msra.mxu0 0.0
    %1141 = vmatprep.subr.mxu0 0.0
    %1142 = vmatpush2.msra.mxu0 0.0
    %1143 = vmatprep.subr.mxu0 0.0
    %1144 = vmatpush2.msra.mxu0 0.0
    %1145 = vmatprep.subr.mxu0 0.0
    %1146 = vmatpush2.msra.mxu0 0.0
    %1147 = vmatprep.subr.mxu0 0.0
    %1148 = vmatpush2.msra.mxu0 0.0
    %1149 = vmatprep.subr.mxu0 0.0
    %1150 = vmatpush2.msra.mxu0 0.0
    %1151 = vmatprep.subr.mxu0 0.0
    %1152 = vmatpush2.msra.mxu0 0.0
    %1153 = vmatprep.subr.mxu0 0.0
    %1154 = vmatpush2.msra.mxu0 0.0
    %1155 = vmatprep.subr.mxu0 0.0
    %1156 = vmatpush2.msra.mxu0 0.0
    %1157 = vmatprep.subr.mxu0 0.0
    %1158 = vmatpush2.msra.mxu0 0.0
    %1159 = vmatprep.subr.mxu0 0.0
    %1160 = vmatpush2.msra.mxu0 0.0
    %1161 = vmatprep.subr.mxu0 0.0
    %1162 = vmatpush2.msra.mxu0 0.0
    %1163 = vmatprep.subr.mxu0 0.0
    %1164 = vmatpush2.msra.mxu0 0.0
    %1165 = vmatprep.subr.mxu0 0.0
    %1166 = vmatpush2.msra.mxu0 0.0
    %1167 = vmatprep.mubr.f32.mxu0 0.0
    %1168 = vmatmul.mubr.f32.gmra.mxu0 %v145
    %v1169 = vpop.f32.mrf.mxu0
    %v1170 = vadd.f32 0.0, %v1169
    %v1171 = vpop.f32.mrf.mxu0
    %1172 = vdwg.mxu0
    %v1173 = vadd.f32 %v1091, %v1170
    %v1174 = vtanh.pop %v1173
    %v1175 = vxor.u32 %v1173, 2147483648
    %v1176 = vmul.f32 %v1175, 1.442695
    %v1177 = vpow.pop %v1176
    %v1178 = vadd.f32 %v1177, 1.0
    %v1179 = vrcp.pop %v1178
    %v1180 = vmul.f32 1.0, %v1179
    %v1181 = vsel %vm37, %v1174, %v1180
    %v1182 = vmul.f32 %v1181, 0.0
    %1184 = vrot.lane.b32.xlu0 %v1181, 64
    %v1185 = vpop.permute.xlu0 %1184
    %v1187 = vmul.f32 %v1181, %v1185
    %1189 = vrot.lane.b32.xlu0 %v1187, 32
    %v1190 = vpop.permute.xlu0 %1189
    %v1192 = vadd.f32 %v1182, %v1190
    %v1193 = vtanh.pop %v1192
    %1195 = vrot.lane.b32.xlu0 %v1193, 64
    %v1196 = vpop.permute.xlu0 %1195
    %v1198 = vmul.f32 %v1181, %v1196
    %1200 = vrot.lane.b32.xlu0 %v1198, 32
    %v1201 = vpop.permute.xlu0 %1200
    %v1202 = vsel %vm143, %v1201, 0
    %1204 = vmatprep.subr.mxu0 0.0
    %1205 = vmatpush1.msra.mxu0 0.0
    %1206 = vmatprep.subr.mxu0 0.0
    %1207 = vmatpush1.msra.mxu0 0.0
    %1208 = vmatprep.subr.mxu0 0.0
    %1209 = vmatpush1.msra.mxu0 0.0
    %1210 = vmatprep.subr.mxu0 0.0
    %1211 = vmatpush1.msra.mxu0 0.0
    %1212 = vmatprep.subr.mxu0 0.0
    %1213 = vmatpush1.msra.mxu0 0.0
    %1214 = vmatprep.subr.mxu0 0.0
    %1215 = vmatpush1.msra.mxu0 0.0
    %1216 = vmatprep.subr.mxu0 0.0
    %1217 = vmatpush1.msra.mxu0 0.0
    %1218 = vmatprep.subr.mxu0 0.0
    %1219 = vmatpush1.msra.mxu0 0.0
    %1220 = vmatprep.subr.mxu0 0.0
    %1221 = vmatpush1.msra.mxu0 0.0
    %1222 = vmatprep.subr.mxu0 0.0
    %1223 = vmatpush1.msra.mxu0 0.0
    %1224 = vmatprep.subr.mxu0 0.0
    %1225 = vmatpush1.msra.mxu0 0.0
    %1226 = vmatprep.subr.mxu0 0.0
    %1227 = vmatpush1.msra.mxu0 0.0
    %1228 = vmatprep.subr.mxu0 0.0
    %1229 = vmatpush1.msra.mxu0 %v1102
    %1230 = vmatprep.subr.mxu0 0.0
    %1231 = vmatpush1.msra.mxu0 %v1101
    %1232 = vmatprep.subr.mxu0 0.0
    %1233 = vmatpush1.msra.mxu0 %v1100
    %1234 = vmatprep.subr.mxu0 0.0
    %1235 = vmatpush1.msra.mxu0 %v1099
    %1236 = vmatprep.subr.mxu0 0.0
    %1237 = vmatpush2.msra.mxu0 0.0
    %1238 = vmatprep.subr.mxu0 0.0
    %1239 = vmatpush2.msra.mxu0 0.0
    %1240 = vmatprep.subr.mxu0 0.0
    %1241 = vmatpush2.msra.mxu0 0.0
    %1242 = vmatprep.subr.mxu0 0.0
    %1243 = vmatpush2.msra.mxu0 0.0
    %1244 = vmatprep.subr.mxu0 0.0
    %1245 = vmatpush2.msra.mxu0 0.0
    %1246 = vmatprep.subr.mxu0 0.0
    %1247 = vmatpush2.msra.mxu0 0.0
    %1248 = vmatprep.subr.mxu0 0.0
    %1249 = vmatpush2.msra.mxu0 0.0
    %1250 = vmatprep.subr.mxu0 0.0
    %1251 = vmatpush2.msra.mxu0 0.0
    %1252 = vmatprep.subr.mxu0 0.0
    %1253 = vmatpush2.msra.mxu0 0.0
    %1254 = vmatprep.subr.mxu0 0.0
    %1255 = vmatpush2.msra.mxu0 0.0
    %1256 = vmatprep.subr.mxu0 0.0
    %1257 = vmatpush2.msra.mxu0 0.0
    %1258 = vmatprep.subr.mxu0 0.0
    %1259 = vmatpush2.msra.mxu0 0.0
    %1260 = vmatprep.subr.mxu0 0.0
    %1261 = vmatpush2.msra.mxu0 0.0
    %1262 = vmatprep.subr.mxu0 0.0
    %1263 = vmatpush2.msra.mxu0 0.0
    %1264 = vmatprep.subr.mxu0 0.0
    %1265 = vmatpush2.msra.mxu0 0.0
    %1266 = vmatprep.subr.mxu0 0.0
    %1267 = vmatpush2.msra.mxu0 0.0
    %1268 = vmatprep.mubr.f32.mxu0 0.0
    %1269 = vmatmul.mubr.f32.gmra.mxu0 %v1202
    %v1270 = vpop.f32.mrf.mxu0
    %v1271 = vadd.f32 0.0, %v1270
    %v1272 = vpop.f32.mrf.mxu0
    %1273 = vdwg.mxu0
    %v1275 = vrot.slane %v1271, 6
    %v1277 = vadd.f32 %v1091, %v1275
    %v1278 = vtanh.pop %v1277
    %v1279 = vxor.u32 %v1277, 2147483648
    %v1280 = vmul.f32 %v1279, 1.442695
    %v1281 = vpow.pop %v1280
    %v1282 = vadd.f32 %v1281, 1.0
    %v1283 = vrcp.pop %v1282
    %v1284 = vmul.f32 1.0, %v1283
    %v1285 = vsel %vm37, %v1278, %v1284
    %v1287 = vrot.slane %v1192, 6
    %v1289 = vmul.f32 %v1285, %v1287
    %1291 = vrot.lane.b32.xlu0 %v1285, 64
    %v1292 = vpop.permute.xlu0 %1291
    %v1294 = vmul.f32 %v1285, %v1292
    %1296 = vrot.lane.b32.xlu0 %v1294, 32
    %v1297 = vpop.permute.xlu0 %1296
    %v1299 = vadd.f32 %v1289, %v1297
    %v1300 = vtanh.pop %v1299
    %1302 = vrot.lane.b32.xlu0 %v1300, 64
    %v1303 = vpop.permute.xlu0 %1302
    %v1305 = vmul.f32 %v1285, %v1303
    %v1307 = vrot.slane %v1305, 2
    %1308 = vrot.lane.b32.xlu0 %v1307, 32
    %v1309 = vpop.permute.xlu0 %1308
    %v1310 = vsel %vm143, %v1309, 0
    %1312 = vmatprep.subr.mxu0 0.0
    %1313 = vmatpush1.msra.mxu0 0.0
    %1314 = vmatprep.subr.mxu0 0.0
    %1315 = vmatpush1.msra.mxu0 0.0
    %1316 = vmatprep.subr.mxu0 0.0
    %1317 = vmatpush1.msra.mxu0 0.0
    %1318 = vmatprep.subr.mxu0 0.0
    %1319 = vmatpush1.msra.mxu0 0.0
    %1320 = vmatprep.subr.mxu0 0.0
    %1321 = vmatpush1.msra.mxu0 0.0
    %1322 = vmatprep.subr.mxu0 0.0
    %1323 = vmatpush1.msra.mxu0 0.0
    %1324 = vmatprep.subr.mxu0 0.0
    %1325 = vmatpush1.msra.mxu0 0.0
    %1326 = vmatprep.subr.mxu0 0.0
    %1327 = vmatpush1.msra.mxu0 0.0
    %1328 = vmatprep.subr.mxu0 0.0
    %1329 = vmatpush1.msra.mxu0 0.0
    %1330 = vmatprep.subr.mxu0 0.0
    %1331 = vmatpush1.msra.mxu0 0.0
    %1332 = vmatprep.subr.mxu0 0.0
    %1333 = vmatpush1.msra.mxu0 0.0
    %1334 = vmatprep.subr.mxu0 0.0
    %1335 = vmatpush1.msra.mxu0 0.0
    %1336 = vmatprep.subr.mxu0 0.0
    %1337 = vmatpush1.msra.mxu0 %v1102
    %1338 = vmatprep.subr.mxu0 0.0
    %1339 = vmatpush1.msra.mxu0 %v1101
    %1340 = vmatprep.subr.mxu0 0.0
    %1341 = vmatpush1.msra.mxu0 %v1100
    %1342 = vmatprep.subr.mxu0 0.0
    %1343 = vmatpush1.msra.mxu0 %v1099
    %1344 = vmatprep.subr.mxu0 0.0
    %1345 = vmatpush2.msra.mxu0 0.0
    %1346 = vmatprep.subr.mxu0 0.0
    %1347 = vmatpush2.msra.mxu0 0.0
    %1348 = vmatprep.subr.mxu0 0.0
    %1349 = vmatpush2.msra.mxu0 0.0
    %1350 = vmatprep.subr.mxu0 0.0
    %1351 = vmatpush2.msra.mxu0 0.0
    %1352 = vmatprep.subr.mxu0 0.0
    %1353 = vmatpush2.msra.mxu0 0.0
    %1354 = vmatprep.subr.mxu0 0.0
    %1355 = vmatpush2.msra.mxu0 0.0
    %1356 = vmatprep.subr.mxu0 0.0
    %1357 = vmatpush2.msra.mxu0 0.0
    %1358 = vmatprep.subr.mxu0 0.0
    %1359 = vmatpush2.msra.mxu0 0.0
    %1360 = vmatprep.subr.mxu0 0.0
    %1361 = vmatpush2.msra.mxu0 0.0
    %1362 = vmatprep.subr.mxu0 0.0
    %1363 = vmatpush2.msra.mxu0 0.0
    %1364 = vmatprep.subr.mxu0 0.0
    %1365 = vmatpush2.msra.mxu0 0.0
    %1366 = vmatprep.subr.mxu0 0.0
    %1367 = vmatpush2.msra.mxu0 0.0
    %1368 = vmatprep.subr.mxu0 0.0
    %1369 = vmatpush2.msra.mxu0 0.0
    %1370 = vmatprep.subr.mxu0 0.0
    %1371 = vmatpush2.msra.mxu0 0.0
    %1372 = vmatprep.subr.mxu0 0.0
    %1373 = vmatpush2.msra.mxu0 0.0
    %1374 = vmatprep.subr.mxu0 0.0
    %1375 = vmatpush2.msra.mxu0 0.0
    %1376 = vmatprep.mubr.f32.mxu0 0.0
    %1377 = vmatmul.mubr.f32.gmra.mxu0 %v1310
    %v1378 = vpop.f32.mrf.mxu0
    %v1379 = vadd.f32 0.0, %v1378
    %v1380 = vpop.f32.mrf.mxu0
    %1381 = vdwg.mxu0
    %v1383 = vrot.slane %v1379, 4
    %v1385 = vadd.f32 %v1091, %v1383
    %v1386 = vtanh.pop %v1385
    %v1387 = vxor.u32 %v1385, 2147483648
    %v1388 = vmul.f32 %v1387, 1.442695
    %v1389 = vpow.pop %v1388
    %v1390 = vadd.f32 %v1389, 1.0
    %v1391 = vrcp.pop %v1390
    %v1392 = vmul.f32 1.0, %v1391
    %v1393 = vsel %vm37, %v1386, %v1392
    %v1395 = vrot.slane %v1299, 6
    %v1397 = vmul.f32 %v1393, %v1395
    %1399 = vrot.lane.b32.xlu0 %v1393, 64
    %v1400 = vpop.permute.xlu0 %1399
    %v1402 = vmul.f32 %v1393, %v1400
    %1404 = vrot.lane.b32.xlu0 %v1402, 32
    %v1405 = vpop.permute.xlu0 %1404
    %v1407 = vadd.f32 %v1397, %v1405
    %v1408 = vtanh.pop %v1407
    %1410 = vrot.lane.b32.xlu0 %v1408, 64
    %v1411 = vpop.permute.xlu0 %1410
    %v1413 = vmul.f32 %v1393, %v1411
    %v1415 = vrot.slane %v1413, 4
    %1416 = vrot.lane.b32.xlu0 %v1415, 32
    %v1417 = vpop.permute.xlu0 %1416
    %v1418 = vsel %vm143, %v1417, 0
    %1420 = vmatprep.subr.mxu0 0.0
    %1421 = vmatpush1.msra.mxu0 0.0
    %1422 = vmatprep.subr.mxu0 0.0
    %1423 = vmatpush1.msra.mxu0 0.0
    %1424 = vmatprep.subr.mxu0 0.0
    %1425 = vmatpush1.msra.mxu0 0.0
    %1426 = vmatprep.subr.mxu0 0.0
    %1427 = vmatpush1.msra.mxu0 0.0
    %1428 = vmatprep.subr.mxu0 0.0
    %1429 = vmatpush1.msra.mxu0 0.0
    %1430 = vmatprep.subr.mxu0 0.0
    %1431 = vmatpush1.msra.mxu0 0.0
    %1432 = vmatprep.subr.mxu0 0.0
    %1433 = vmatpush1.msra.mxu0 0.0
    %1434 = vmatprep.subr.mxu0 0.0
    %1435 = vmatpush1.msra.mxu0 0.0
    %1436 = vmatprep.subr.mxu0 0.0
    %1437 = vmatpush1.msra.mxu0 0.0
    %1438 = vmatprep.subr.mxu0 0.0
    %1439 = vmatpush1.msra.mxu0 0.0
    %1440 = vmatprep.subr.mxu0 0.0
    %1441 = vmatpush1.msra.mxu0 0.0
    %1442 = vmatprep.subr.mxu0 0.0
    %1443 = vmatpush1.msra.mxu0 0.0
    %1444 = vmatprep.subr.mxu0 0.0
    %1445 = vmatpush1.msra.mxu0 %v1102
    %1446 = vmatprep.subr.mxu0 0.0
    %1447 = vmatpush1.msra.mxu0 %v1101
    %1448 = vmatprep.subr.mxu0 0.0
    %1449 = vmatpush1.msra.mxu0 %v1100
    %1450 = vmatprep.subr.mxu0 0.0
    %1451 = vmatpush1.msra.mxu0 %v1099
    %1452 = vmatprep.subr.mxu0 0.0
    %1453 = vmatpush2.msra.mxu0 0.0
    %1454 = vmatprep.subr.mxu0 0.0
    %1455 = vmatpush2.msra.mxu0 0.0
    %1456 = vmatprep.subr.mxu0 0.0
    %1457 = vmatpush2.msra.mxu0 0.0
    %1458 = vmatprep.subr.mxu0 0.0
    %1459 = vmatpush2.msra.mxu0 0.0
    %1460 = vmatprep.subr.mxu0 0.0
    %1461 = vmatpush2.msra.mxu0 0.0
    %1462 = vmatprep.subr.mxu0 0.0
    %1463 = vmatpush2.msra.mxu0 0.0
    %1464 = vmatprep.subr.mxu0 0.0
    %1465 = vmatpush2.msra.mxu0 0.0
    %1466 = vmatprep.subr.mxu0 0.0
    %1467 = vmatpush2.msra.mxu0 0.0
    %1468 = vmatprep.subr.mxu0 0.0
    %1469 = vmatpush2.msra.mxu0 0.0
    %1470 = vmatprep.subr.mxu0 0.0
    %1471 = vmatpush2.msra.mxu0 0.0
    %1472 = vmatprep.subr.mxu0 0.0
    %1473 = vmatpush2.msra.mxu0 0.0
    %1474 = vmatprep.subr.mxu0 0.0
    %1475 = vmatpush2.msra.mxu0 0.0
    %1476 = vmatprep.subr.mxu0 0.0
    %1477 = vmatpush2.msra.mxu0 0.0
    %1478 = vmatprep.subr.mxu0 0.0
    %1479 = vmatpush2.msra.mxu0 0.0
    %1480 = vmatprep.subr.mxu0 0.0
    %1481 = vmatpush2.msra.mxu0 0.0
    %1482 = vmatprep.subr.mxu0 0.0
    %1483 = vmatpush2.msra.mxu0 0.0
    %1484 = vmatprep.mubr.f32.mxu0 0.0
    %1485 = vmatmul.mubr.f32.gmra.mxu0 %v1418
    %v1486 = vpop.f32.mrf.mxu0
    %v1487 = vadd.f32 0.0, %v1486
    %v1488 = vpop.f32.mrf.mxu0
    %1489 = vdwg.mxu0
    %v1491 = vrot.slane %v1487, 2
    %v1493 = vadd.f32 %v1091, %v1491
    %v1494 = vtanh.pop %v1493
    %v1495 = vxor.u32 %v1493, 2147483648
    %v1496 = vmul.f32 %v1495, 1.442695
    %v1497 = vpow.pop %v1496
    %v1498 = vadd.f32 %v1497, 1.0
    %v1499 = vrcp.pop %v1498
    %v1500 = vmul.f32 1.0, %v1499
    %v1501 = vsel %vm37, %v1494, %v1500
    %v1503 = vrot.slane %v1407, 6
    %v1505 = vmul.f32 %v1501, %v1503
    %1507 = vrot.lane.b32.xlu0 %v1501, 64
    %v1508 = vpop.permute.xlu0 %1507
    %v1510 = vmul.f32 %v1501, %v1508
    %1512 = vrot.lane.b32.xlu0 %v1510, 32
    %v1513 = vpop.permute.xlu0 %1512
    %v1515 = vadd.f32 %v1505, %v1513
    %v1516 = vtanh.pop %v1515
    %1518 = vrot.lane.b32.xlu0 %v1516, 64
    %v1519 = vpop.permute.xlu0 %1518
    %v1521 = vmul.f32 %v1501, %v1519
    %v1523 = vrot.slane %v1521, 6
    %1524 = vrot.lane.b32.xlu0 %v1523, 32
    %v1525 = vpop.permute.xlu0 %1524
    %v1526 = vsel %vm143, %v1525, 0
    %1528 = vmatprep.subr.mxu0 0.0
    %1529 = vmatpush1.msra.mxu0 0.0
    %1530 = vmatprep.subr.mxu0 0.0
    %1531 = vmatpush1.msra.mxu0 0.0
    %1532 = vmatprep.subr.mxu0 0.0
    %1533 = vmatpush1.msra.mxu0 0.0
    %1534 = vmatprep.subr.mxu0 0.0
    %1535 = vmatpush1.msra.mxu0 0.0
    %1536 = vmatprep.subr.mxu0 0.0
    %1537 = vmatpush1.msra.mxu0 0.0
    %1538 = vmatprep.subr.mxu0 0.0
    %1539 = vmatpush1.msra.mxu0 0.0
    %1540 = vmatprep.subr.mxu0 0.0
    %1541 = vmatpush1.msra.mxu0 0.0
    %1542 = vmatprep.subr.mxu0 0.0
    %1543 = vmatpush1.msra.mxu0 0.0
    %1544 = vmatprep.subr.mxu0 0.0
    %1545 = vmatpush1.msra.mxu0 0.0
    %1546 = vmatprep.subr.mxu0 0.0
    %1547 = vmatpush1.msra.mxu0 0.0
    %1548 = vmatprep.subr.mxu0 0.0
    %1549 = vmatpush1.msra.mxu0 0.0
    %1550 = vmatprep.subr.mxu0 0.0
    %1551 = vmatpush1.msra.mxu0 0.0
    %1552 = vmatprep.subr.mxu0 0.0
    %1553 = vmatpush1.msra.mxu0 %v1102
    %1554 = vmatprep.subr.mxu0 0.0
    %1555 = vmatpush1.msra.mxu0 %v1101
    %1556 = vmatprep.subr.mxu0 0.0
    %1557 = vmatpush1.msra.mxu0 %v1100
    %1558 = vmatprep.subr.mxu0 0.0
    %1559 = vmatpush1.msra.mxu0 %v1099
    %1560 = vmatprep.subr.mxu0 0.0
    %1561 = vmatpush2.msra.mxu0 0.0
    %1562 = vmatprep.subr.mxu0 0.0
    %1563 = vmatpush2.msra.mxu0 0.0
    %1564 = vmatprep.subr.mxu0 0.0
    %1565 = vmatpush2.msra.mxu0 0.0
    %1566 = vmatprep.subr.mxu0 0.0
    %1567 = vmatpush2.msra.mxu0 0.0
    %1568 = vmatprep.subr.mxu0 0.0
    %1569 = vmatpush2.msra.mxu0 0.0
    %1570 = vmatprep.subr.mxu0 0.0
    %1571 = vmatpush2.msra.mxu0 0.0
    %1572 = vmatprep.subr.mxu0 0.0
    %1573 = vmatpush2.msra.mxu0 0.0
    %1574 = vmatprep.subr.mxu0 0.0
    %1575 = vmatpush2.msra.mxu0 0.0
    %1576 = vmatprep.subr.mxu0 0.0
    %1577 = vmatpush2.msra.mxu0 0.0
    %1578 = vmatprep.subr.mxu0 0.0
    %1579 = vmatpush2.msra.mxu0 0.0
    %1580 = vmatprep.subr.mxu0 0.0
    %1581 = vmatpush2.msra.mxu0 0.0
    %1582 = vmatprep.subr.mxu0 0.0
    %1583 = vmatpush2.msra.mxu0 0.0
    %1584 = vmatprep.subr.mxu0 0.0
    %1585 = vmatpush2.msra.mxu0 0.0
    %1586 = vmatprep.subr.mxu0 0.0
    %1587 = vmatpush2.msra.mxu0 0.0
    %1588 = vmatprep.subr.mxu0 0.0
    %1589 = vmatpush2.msra.mxu0 0.0
    %1590 = vmatprep.subr.mxu0 0.0
    %1591 = vmatpush2.msra.mxu0 0.0
    %1592 = vmatprep.mubr.f32.mxu0 0.0
    %1593 = vmatmul.mubr.f32.gmra.mxu0 %v1526
    %v1594 = vpop.f32.mrf.mxu0
    %v1595 = vadd.f32 0.0, %v1594
    %v1596 = vpop.f32.mrf.mxu0
    %1597 = vdwg.mxu0
    %v1598 = vadd.f32 %v1096, %v1595
    %v1599 = vtanh.pop %v1598
    %v1600 = vxor.u32 %v1598, 2147483648
    %v1601 = vmul.f32 %v1600, 1.442695
    %v1602 = vpow.pop %v1601
    %v1603 = vadd.f32 %v1602, 1.0
    %v1604 = vrcp.pop %v1603
    %v1605 = vmul.f32 1.0, %v1604
    %v1606 = vsel %vm37, %v1599, %v1605
    %v1608 = vrot.slane %v1515, 6
    %v1610 = vmul.f32 %v1606, %v1608
    %1612 = vrot.lane.b32.xlu0 %v1606, 64
    %v1613 = vpop.permute.xlu0 %1612
    %v1615 = vmul.f32 %v1606, %v1613
    %1617 = vrot.lane.b32.xlu0 %v1615, 32
    %v1618 = vpop.permute.xlu0 %1617
    %v1620 = vadd.f32 %v1610, %v1618
    %v1621 = vtanh.pop %v1620
    %1623 = vrot.lane.b32.xlu0 %v1621, 64
    %v1624 = vpop.permute.xlu0 %1623
    %v1626 = vmul.f32 %v1606, %v1624
    %1628 = vrot.lane.b32.xlu0 %v1626, 32
    %v1629 = vpop.permute.xlu0 %1628
    %v1630 = vsel %vm143, %v1629, 0
    %1632 = vmatprep.subr.mxu0 0.0
    %1633 = vmatpush1.msra.mxu0 0.0
    %1634 = vmatprep.subr.mxu0 0.0
    %1635 = vmatpush1.msra.mxu0 0.0
    %1636 = vmatprep.subr.mxu0 0.0
    %1637 = vmatpush1.msra.mxu0 0.0
    %1638 = vmatprep.subr.mxu0 0.0
    %1639 = vmatpush1.msra.mxu0 0.0
    %1640 = vmatprep.subr.mxu0 0.0
    %1641 = vmatpush1.msra.mxu0 0.0
    %1642 = vmatprep.subr.mxu0 0.0
    %1643 = vmatpush1.msra.mxu0 0.0
    %1644 = vmatprep.subr.mxu0 0.0
    %1645 = vmatpush1.msra.mxu0 0.0
    %1646 = vmatprep.subr.mxu0 0.0
    %1647 = vmatpush1.msra.mxu0 0.0
    %1648 = vmatprep.subr.mxu0 0.0
    %1649 = vmatpush1.msra.mxu0 0.0
    %1650 = vmatprep.subr.mxu0 0.0
    %1651 = vmatpush1.msra.mxu0 0.0
    %1652 = vmatprep.subr.mxu0 0.0
    %1653 = vmatpush1.msra.mxu0 0.0
    %1654 = vmatprep.subr.mxu0 0.0
    %1655 = vmatpush1.msra.mxu0 0.0
    %1656 = vmatprep.subr.mxu0 0.0
    %1657 = vmatpush1.msra.mxu0 %v1102
    %1658 = vmatprep.subr.mxu0 0.0
    %1659 = vmatpush1.msra.mxu0 %v1101
    %1660 = vmatprep.subr.mxu0 0.0
    %1661 = vmatpush1.msra.mxu0 %v1100
    %1662 = vmatprep.subr.mxu0 0.0
    %1663 = vmatpush1.msra.mxu0 %v1099
    %1664 = vmatprep.subr.mxu0 0.0
    %1665 = vmatpush2.msra.mxu0 0.0
    %1666 = vmatprep.subr.mxu0 0.0
    %1667 = vmatpush2.msra.mxu0 0.0
    %1668 = vmatprep.subr.mxu0 0.0
    %1669 = vmatpush2.msra.mxu0 0.0
    %1670 = vmatprep.subr.mxu0 0.0
    %1671 = vmatpush2.msra.mxu0 0.0
    %1672 = vmatprep.subr.mxu0 0.0
    %1673 = vmatpush2.msra.mxu0 0.0
    %1674 = vmatprep.subr.mxu0 0.0
    %1675 = vmatpush2.msra.mxu0 0.0
    %1676 = vmatprep.subr.mxu0 0.0
    %1677 = vmatpush2.msra.mxu0 0.0
    %1678 = vmatprep.subr.mxu0 0.0
    %1679 = vmatpush2.msra.mxu0 0.0
    %1680 = vmatprep.subr.mxu0 0.0
    %1681 = vmatpush2.msra.mxu0 0.0
    %1682 = vmatprep.subr.mxu0 0.0
    %1683 = vmatpush2.msra.mxu0 0.0
    %1684 = vmatprep.subr.mxu0 0.0
    %1685 = vmatpush2.msra.mxu0 0.0
    %1686 = vmatprep.subr.mxu0 0.0
    %1687 = vmatpush2.msra.mxu0 0.0
    %1688 = vmatprep.subr.mxu0 0.0
    %1689 = vmatpush2.msra.mxu0 0.0
    %1690 = vmatprep.subr.mxu0 0.0
    %1691 = vmatpush2.msra.mxu0 0.0
    %1692 = vmatprep.subr.mxu0 0.0
    %1693 = vmatpush2.msra.mxu0 0.0
    %1694 = vmatprep.subr.mxu0 0.0
    %1695 = vmatpush2.msra.mxu0 0.0
    %1696 = vmatprep.mubr.f32.mxu0 0.0
    %1697 = vmatmul.mubr.f32.gmra.mxu0 %v1630
    %v1698 = vpop.f32.mrf.mxu0
    %v1699 = vadd.f32 0.0, %v1698
    %v1700 = vpop.f32.mrf.mxu0
    %1701 = vdwg.mxu0
    %v1703 = vrot.slane %v1699, 6
    %v1705 = vadd.f32 %v1096, %v1703
    %v1706 = vtanh.pop %v1705
    %v1707 = vxor.u32 %v1705, 2147483648
    %v1708 = vmul.f32 %v1707, 1.442695
    %v1709 = vpow.pop %v1708
    %v1710 = vadd.f32 %v1709, 1.0
    %v1711 = vrcp.pop %v1710
    %v1712 = vmul.f32 1.0, %v1711
    %v1713 = vsel %vm37, %v1706, %v1712
    %v1715 = vrot.slane %v1620, 6
    %v1717 = vmul.f32 %v1713, %v1715
    %1719 = vrot.lane.b32.xlu0 %v1713, 64
    %v1720 = vpop.permute.xlu0 %1719
    %v1722 = vmul.f32 %v1713, %v1720
    %1724 = vrot.lane.b32.xlu0 %v1722, 32
    %v1725 = vpop.permute.xlu0 %1724
    %v1727 = vadd.f32 %v1717, %v1725
    %v1728 = vtanh.pop %v1727
    %1730 = vrot.lane.b32.xlu0 %v1728, 64
    %v1731 = vpop.permute.xlu0 %1730
    %v1733 = vmul.f32 %v1713, %v1731
    %v1735 = vrot.slane %v1733, 2
    %1736 = vrot.lane.b32.xlu0 %v1735, 32
    %v1737 = vpop.permute.xlu0 %1736
    %v1738 = vsel %vm143, %v1737, 0
    %1740 = vmatprep.subr.mxu0 0.0
    %1741 = vmatpush1.msra.mxu0 0.0
    %1742 = vmatprep.subr.mxu0 0.0
    %1743 = vmatpush1.msra.mxu0 0.0
    %1744 = vmatprep.subr.mxu0 0.0
    %1745 = vmatpush1.msra.mxu0 0.0
    %1746 = vmatprep.subr.mxu0 0.0
    %1747 = vmatpush1.msra.mxu0 0.0
    %1748 = vmatprep.subr.mxu0 0.0
    %1749 = vmatpush1.msra.mxu0 0.0
    %1750 = vmatprep.subr.mxu0 0.0
    %1751 = vmatpush1.msra.mxu0 0.0
    %1752 = vmatprep.subr.mxu0 0.0
    %1753 = vmatpush1.msra.mxu0 0.0
    %1754 = vmatprep.subr.mxu0 0.0
    %1755 = vmatpush1.msra.mxu0 0.0
    %1756 = vmatprep.subr.mxu0 0.0
    %1757 = vmatpush1.msra.mxu0 0.0
    %1758 = vmatprep.subr.mxu0 0.0
    %1759 = vmatpush1.msra.mxu0 0.0
    %1760 = vmatprep.subr.mxu0 0.0
    %1761 = vmatpush1.msra.mxu0 0.0
    %1762 = vmatprep.subr.mxu0 0.0
    %1763 = vmatpush1.msra.mxu0 0.0
    %1764 = vmatprep.subr.mxu0 0.0
    %1765 = vmatpush1.msra.mxu0 %v1102
    %1766 = vmatprep.subr.mxu0 0.0
    %1767 = vmatpush1.msra.mxu0 %v1101
    %1768 = vmatprep.subr.mxu0 0.0
    %1769 = vmatpush1.msra.mxu0 %v1100
    %1770 = vmatprep.subr.mxu0 0.0
    %1771 = vmatpush1.msra.mxu0 %v1099
    %1772 = vmatprep.subr.mxu0 0.0
    %1773 = vmatpush2.msra.mxu0 0.0
    %1774 = vmatprep.subr.mxu0 0.0
    %1775 = vmatpush2.msra.mxu0 0.0
    %1776 = vmatprep.subr.mxu0 0.0
    %1777 = vmatpush2.msra.mxu0 0.0
    %1778 = vmatprep.subr.mxu0 0.0
    %1779 = vmatpush2.msra.mxu0 0.0
    %1780 = vmatprep.subr.mxu0 0.0
    %1781 = vmatpush2.msra.mxu0 0.0
    %1782 = vmatprep.subr.mxu0 0.0
    %1783 = vmatpush2.msra.mxu0 0.0
    %1784 = vmatprep.subr.mxu0 0.0
    %1785 = vmatpush2.msra.mxu0 0.0
    %1786 = vmatprep.subr.mxu0 0.0
    %1787 = vmatpush2.msra.mxu0 0.0
    %1788 = vmatprep.subr.mxu0 0.0
    %1789 = vmatpush2.msra.mxu0 0.0
    %1790 = vmatprep.subr.mxu0 0.0
    %1791 = vmatpush2.msra.mxu0 0.0
    %1792 = vmatprep.subr.mxu0 0.0
    %1793 = vmatpush2.msra.mxu0 0.0
    %1794 = vmatprep.subr.mxu0 0.0
    %1795 = vmatpush2.msra.mxu0 0.0
    %1796 = vmatprep.subr.mxu0 0.0
    %1797 = vmatpush2.msra.mxu0 0.0
    %1798 = vmatprep.subr.mxu0 0.0
    %1799 = vmatpush2.msra.mxu0 0.0
    %1800 = vmatprep.subr.mxu0 0.0
    %1801 = vmatpush2.msra.mxu0 0.0
    %1802 = vmatprep.subr.mxu0 0.0
    %1803 = vmatpush2.msra.mxu0 0.0
    %1804 = vmatprep.mubr.f32.mxu0 0.0
    %1805 = vmatmul.mubr.f32.gmra.mxu0 %v1738
    %v1806 = vpop.f32.mrf.mxu0
    %v1807 = vadd.f32 0.0, %v1806
    %v1808 = vpop.f32.mrf.mxu0
    %1809 = vdwg.mxu0
    %v1811 = vrot.slane %v1807, 4
    %v1813 = vadd.f32 %v1096, %v1811
    %v1814 = vtanh.pop %v1813
    %v1815 = vxor.u32 %v1813, 2147483648
    %v1816 = vmul.f32 %v1815, 1.442695
    %v1817 = vpow.pop %v1816
    %v1818 = vadd.f32 %v1817, 1.0
    %v1819 = vrcp.pop %v1818
    %v1820 = vmul.f32 1.0, %v1819
    %v1821 = vsel %vm37, %v1814, %v1820
    %v1823 = vrot.slane %v1727, 6
    %v1825 = vmul.f32 %v1821, %v1823
    %1827 = vrot.lane.b32.xlu0 %v1821, 64
    %v1828 = vpop.permute.xlu0 %1827
    %v1830 = vmul.f32 %v1821, %v1828
    %1832 = vrot.lane.b32.xlu0 %v1830, 32
    %v1833 = vpop.permute.xlu0 %1832
    %v1835 = vadd.f32 %v1825, %v1833
    %v1836 = vtanh.pop %v1835
    %1838 = vrot.lane.b32.xlu0 %v1836, 64
    %v1839 = vpop.permute.xlu0 %1838
    %v1841 = vmul.f32 %v1821, %v1839
    %v1843 = vrot.slane %v1841, 4
    %1844 = vrot.lane.b32.xlu0 %v1843, 32
    %v1845 = vpop.permute.xlu0 %1844
    %v1846 = vsel %vm143, %v1845, 0
    %1848 = vmatprep.subr.mxu0 0.0
    %1849 = vmatpush1.msra.mxu0 0.0
    %1850 = vmatprep.subr.mxu0 0.0
    %1851 = vmatpush1.msra.mxu0 0.0
    %1852 = vmatprep.subr.mxu0 0.0
    %1853 = vmatpush1.msra.mxu0 0.0
    %1854 = vmatprep.subr.mxu0 0.0
    %1855 = vmatpush1.msra.mxu0 0.0
    %1856 = vmatprep.subr.mxu0 0.0
    %1857 = vmatpush1.msra.mxu0 0.0
    %1858 = vmatprep.subr.mxu0 0.0
    %1859 = vmatpush1.msra.mxu0 0.0
    %1860 = vmatprep.subr.mxu0 0.0
    %1861 = vmatpush1.msra.mxu0 0.0
    %1862 = vmatprep.subr.mxu0 0.0
    %1863 = vmatpush1.msra.mxu0 0.0
    %1864 = vmatprep.subr.mxu0 0.0
    %1865 = vmatpush1.msra.mxu0 0.0
    %1866 = vmatprep.subr.mxu0 0.0
    %1867 = vmatpush1.msra.mxu0 0.0
    %1868 = vmatprep.subr.mxu0 0.0
    %1869 = vmatpush1.msra.mxu0 0.0
    %1870 = vmatprep.subr.mxu0 0.0
    %1871 = vmatpush1.msra.mxu0 0.0
    %1872 = vmatprep.subr.mxu0 0.0
    %1873 = vmatpush1.msra.mxu0 %v1102
    %1874 = vmatprep.subr.mxu0 0.0
    %1875 = vmatpush1.msra.mxu0 %v1101
    %1876 = vmatprep.subr.mxu0 0.0
    %1877 = vmatpush1.msra.mxu0 %v1100
    %1878 = vmatprep.subr.mxu0 0.0
    %1879 = vmatpush1.msra.mxu0 %v1099
    %1880 = vmatprep.subr.mxu0 0.0
    %1881 = vmatpush2.msra.mxu0 0.0
    %1882 = vmatprep.subr.mxu0 0.0
    %1883 = vmatpush2.msra.mxu0 0.0
    %1884 = vmatprep.subr.mxu0 0.0
    %1885 = vmatpush2.msra.mxu0 0.0
    %1886 = vmatprep.subr.mxu0 0.0
    %1887 = vmatpush2.msra.mxu0 0.0
    %1888 = vmatprep.subr.mxu0 0.0
    %1889 = vmatpush2.msra.mxu0 0.0
    %1890 = vmatprep.subr.mxu0 0.0
    %1891 = vmatpush2.msra.mxu0 0.0
    %1892 = vmatprep.subr.mxu0 0.0
    %1893 = vmatpush2.msra.mxu0 0.0
    %1894 = vmatprep.subr.mxu0 0.0
    %1895 = vmatpush2.msra.mxu0 0.0
    %1896 = vmatprep.subr.mxu0 0.0
    %1897 = vmatpush2.msra.mxu0 0.0
    %1898 = vmatprep.subr.mxu0 0.0
    %1899 = vmatpush2.msra.mxu0 0.0
    %1900 = vmatprep.subr.mxu0 0.0
    %1901 = vmatpush2.msra.mxu0 0.0
    %1902 = vmatprep.subr.mxu0 0.0
    %1903 = vmatpush2.msra.mxu0 0.0
    %1904 = vmatprep.subr.mxu0 0.0
    %1905 = vmatpush2.msra.mxu0 0.0
    %1906 = vmatprep.subr.mxu0 0.0
    %1907 = vmatpush2.msra.mxu0 0.0
    %1908 = vmatprep.subr.mxu0 0.0
    %1909 = vmatpush2.msra.mxu0 0.0
    %1910 = vmatprep.subr.mxu0 0.0
    %1911 = vmatpush2.msra.mxu0 0.0
    %1912 = vmatprep.mubr.f32.mxu0 0.0
    %1913 = vmatmul.mubr.f32.gmra.mxu0 %v1846
    %v1914 = vpop.f32.mrf.mxu0
    %v1915 = vadd.f32 0.0, %v1914
    %v1916 = vpop.f32.mrf.mxu0
    %1917 = vdwg.mxu0
    %v1919 = vrot.slane %v1915, 2
    %v1921 = vadd.f32 %v1096, %v1919
    %v1922 = vtanh.pop %v1921
    %v1923 = vxor.u32 %v1921, 2147483648
    %v1924 = vmul.f32 %v1923, 1.442695
    %v1925 = vpow.pop %v1924
    %v1926 = vadd.f32 %v1925, 1.0
    %v1927 = vrcp.pop %v1926
    %v1928 = vmul.f32 1.0, %v1927
    %v1929 = vsel %vm37, %v1922, %v1928
    %v1931 = vrot.slane %v1835, 6
    %v1933 = vmul.f32 %v1929, %v1931
    %1935 = vrot.lane.b32.xlu0 %v1929, 64
    %v1936 = vpop.permute.xlu0 %1935
    %v1938 = vmul.f32 %v1929, %v1936
    %1940 = vrot.lane.b32.xlu0 %v1938, 32
    %v1941 = vpop.permute.xlu0 %1940
    %v1943 = vadd.f32 %v1933, %v1941
    %v1944 = vtanh.pop %v1943
    %1946 = vrot.lane.b32.xlu0 %v1944, 64
    %v1947 = vpop.permute.xlu0 %1946
    %v1949 = vmul.f32 %v1929, %v1947
    %v1951 = vrot.slane %v1198, 1
    %1952 = vrot.lane.b32.xlu0 %v1951, 64
    %v1953 = vpop.permute.xlu0 %1952
    %1955 = vrot.lane.b32.xlu0 %v1307, 96
    %v1956 = vpop.permute.xlu0 %1955
    %v1958 = vrot.slane %v1305, 3
    %v1961 = vrot.slane %v1413, 5
    %1962 = vrot.lane.b32.xlu0 %v1961, 64
    %v1963 = vpop.permute.xlu0 %1962
    %1965 = vrot.lane.b32.xlu0 %v1523, 96
    %v1966 = vpop.permute.xlu0 %1965
    %v1968 = vrot.slane %v1521, 7
    %v1970 = vsel %vm143, %v1201, %v1953
    %vm1971 = vcmask 523264
    %v1972 = vsel %vm1971, %v1970, %v1956
    %vm1973 = vcmask 785408
    %v1974 = vsel %vm1973, %v1972, %v1958
    %v1975 = vsel %vm143, %v1417, %v1963
    %v1976 = vsel %vm1971, %v1975, %v1966
    %v1977 = vsel %vm1973, %v1976, %v1968
    %v1979 = vrot.slane %v1626, 1
    %1980 = vrot.lane.b32.xlu0 %v1979, 64
    %v1981 = vpop.permute.xlu0 %1980
    %1983 = vrot.lane.b32.xlu0 %v1735, 96
    %v1984 = vpop.permute.xlu0 %1983
    %v1986 = vrot.slane %v1733, 3
    %v1989 = vrot.slane %v1841, 5
    %1990 = vrot.lane.b32.xlu0 %v1989, 64
    %v1991 = vpop.permute.xlu0 %1990
    %v1994 = vrot.slane %v1949, 6
    %1995 = vrot.lane.b32.xlu0 %v1994, 96
    %v1996 = vpop.permute.xlu0 %1995
    %v1998 = vrot.slane %v1949, 7
    %v2000 = vsel %vm143, %v1629, %v1981
    %v2001 = vsel %vm1971, %v2000, %v1984
    %v2002 = vsel %vm1973, %v2001, %v1986
    %v2003 = vsel %vm143, %v1845, %v1991
    %v2004 = vsel %vm1971, %v2003, %v1996
    %v2005 = vsel %vm1973, %v2004, %v1998
    %v2008 = vrot.slane %v2002, 7
    %v2009 = vrot.slane %v2005, 7
    %vm2012 = vcmask 1040384
    %v2013 = vsel %vm2012, %v1974, %v2008
    %v2014 = vsel %vm2012, %v1977, %v2009
    %v2015 = vld [vmem:[%s7] sm:$0xff]
    %v2016 = vld [vmem:[%s7 + $0x8] sm:$0xff]
    %v2017 = vld [vmem:[%s7 + $0x10] sm:$0xff]
    %v2018 = vld [vmem:[%s7 + $0x18] sm:$0xff]
    %v2019 = vld [vmem:[%s7 + $0x20] sm:$0xff]
    %v2020 = vld [vmem:[%s7 + $0x28] sm:$0xff]
    %v2021 = vld [vmem:[%s7 + $0x30] sm:$0xff]
    %v2022 = vld [vmem:[%s7 + $0x38] sm:$0xff]
    %v2023 = vld [vmem:[%s7 + $0x40] sm:$0xff]
    %v2024 = vld [vmem:[%s7 + $0x48] sm:$0xff]
    %v2025 = vld [vmem:[%s7 + $0x50] sm:$0xff]
    %v2026 = vld [vmem:[%s7 + $0x58] sm:$0xff]
    %v2027 = vld [vmem:[%s7 + $0x60] sm:$0xff]
    %v2028 = vld [vmem:[%s7 + $0x68] sm:$0xff]
    %v2029 = vld [vmem:[%s7 + $0x70] sm:$0xff]
    %v2030 = vld [vmem:[%s7 + $0x78] sm:$0xff]
    %v2031 = vld [vmem:[%s7 + $0x80] sm:$0xff]
    %v2032 = vld [vmem:[%s7 + $0x88] sm:$0xff]
    %v2033 = vld [vmem:[%s7 + $0x90] sm:$0xff]
    %v2034 = vld [vmem:[%s7 + $0x98] sm:$0xff]
    %v2035 = vld [vmem:[%s7 + $0xa0] sm:$0xff]
    %v2036 = vld [vmem:[%s7 + $0xa8] sm:$0xff]
    %v2037 = vld [vmem:[%s7 + $0xb0] sm:$0xff]
    %v2038 = vld [vmem:[%s7 + $0xb8] sm:$0xff]
    %v2039 = vld [vmem:[%s7 + $0xc0] sm:$0xff]
    %v2040 = vld [vmem:[%s7 + $0xc8] sm:$0xff]
    %v2041 = vld [vmem:[%s7 + $0xd0] sm:$0xff]
    %v2042 = vld [vmem:[%s7 + $0xd8] sm:$0xff]
    %v2043 = vld [vmem:[%s7 + $0xe0] sm:$0xff]
    %v2044 = vld [vmem:[%s7 + $0xe8] sm:$0xff]
    %v2045 = vld [vmem:[%s7 + $0xf0] sm:$0xff]
    %v2046 = vld [vmem:[%s7 + $0xf8] sm:$0xff]
    %v2047 = vld [vmem:[%s8] sm:$0x1]
    %v2049 = vlaneseq
    %v2050 = vshrl.u32 %v2049, 7
    %v2051 = vsub.s32 0, %v2050
    %v2052 = vrot.slane %v2047, %v2051
    %2054 = vmatprep.subr.mxu0 0.0
    %2055 = vmatpush1.msra.mxu0 %v2030
    %2056 = vmatprep.subr.mxu0 0.0
    %2057 = vmatpush1.msra.mxu0 %v2029
    %2058 = vmatprep.subr.mxu0 0.0
    %2059 = vmatpush1.msra.mxu0 %v2028
    %2060 = vmatprep.subr.mxu0 0.0
    %2061 = vmatpush1.msra.mxu0 %v2027
    %2062 = vmatprep.subr.mxu0 0.0
    %2063 = vmatpush1.msra.mxu0 %v2026
    %2064 = vmatprep.subr.mxu0 0.0
    %2065 = vmatpush1.msra.mxu0 %v2025
    %2066 = vmatprep.subr.mxu0 0.0
    %2067 = vmatpush1.msra.mxu0 %v2024
    %2068 = vmatprep.subr.mxu0 0.0
    %2069 = vmatpush1.msra.mxu0 %v2023
    %2070 = vmatprep.subr.mxu0 0.0
    %2071 = vmatpush1.msra.mxu0 %v2022
    %2072 = vmatprep.subr.mxu0 0.0
    %2073 = vmatpush1.msra.mxu0 %v2021
    %2074 = vmatprep.subr.mxu0 0.0
    %2075 = vmatpush1.msra.mxu0 %v2020
    %2076 = vmatprep.subr.mxu0 0.0
    %2077 = vmatpush1.msra.mxu0 %v2019
    %2078 = vmatprep.subr.mxu0 0.0
    %2079 = vmatpush1.msra.mxu0 %v2018
    %2080 = vmatprep.subr.mxu0 0.0
    %2081 = vmatpush1.msra.mxu0 %v2017
    %2082 = vmatprep.subr.mxu0 0.0
    %2083 = vmatpush1.msra.mxu0 %v2016
    %2084 = vmatprep.subr.mxu0 0.0
    %2085 = vmatpush1.msra.mxu0 %v2015
    %2086 = vmatprep.subr.mxu0 0.0
    %2087 = vmatpush2.msra.mxu0 %v2046
    %2088 = vmatprep.subr.mxu0 0.0
    %2089 = vmatpush2.msra.mxu0 %v2045
    %2090 = vmatprep.subr.mxu0 0.0
    %2091 = vmatpush2.msra.mxu0 %v2044
    %2092 = vmatprep.subr.mxu0 0.0
    %2093 = vmatpush2.msra.mxu0 %v2043
    %2094 = vmatprep.subr.mxu0 0.0
    %2095 = vmatpush2.msra.mxu0 %v2042
    %2096 = vmatprep.subr.mxu0 0.0
    %2097 = vmatpush2.msra.mxu0 %v2041
    %2098 = vmatprep.subr.mxu0 0.0
    %2099 = vmatpush2.msra.mxu0 %v2040
    %2100 = vmatprep.subr.mxu0 0.0
    %2101 = vmatpush2.msra.mxu0 %v2039
    %2102 = vmatprep.subr.mxu0 0.0
    %2103 = vmatpush2.msra.mxu0 %v2038
    %2104 = vmatprep.subr.mxu0 0.0
    %2105 = vmatpush2.msra.mxu0 %v2037
    %2106 = vmatprep.subr.mxu0 0.0
    %2107 = vmatpush2.msra.mxu0 %v2036
    %2108 = vmatprep.subr.mxu0 0.0
    %2109 = vmatpush2.msra.mxu0 %v2035
    %2110 = vmatprep.subr.mxu0 0.0
    %2111 = vmatpush2.msra.mxu0 %v2034
    %2112 = vmatprep.subr.mxu0 0.0
    %2113 = vmatpush2.msra.mxu0 %v2033
    %2114 = vmatprep.subr.mxu0 0.0
    %2115 = vmatpush2.msra.mxu0 %v2032
    %2116 = vmatprep.subr.mxu0 0.0
    %2117 = vmatpush2.msra.mxu0 %v2031
    %2118 = vmatprep.mubr.f32.mxu0 %v2014
    %2119 = vmatmul.mubr.f32.gmra.mxu0 %v2013
    %v2120 = vpop.f32.mrf.mxu0
    %v2121 = vadd.f32 %v2052, %v2120
    %v2122 = vpop.f32.mrf.mxu0
    %2123 = vdwg.mxu0
    %vm2124 = vcmask 25600
    %2125 = vst.msk [vmem:[#allocation2] sm:$0x3] %vm2124, %v2121
    // Predicated region
    $region38: #{lstm_forward.1} parent=1 // pred_check
      _
    $region39: #{lstm_forward.1} parent=1 // pred_check_branch
      %2127 = sbr.rel (0) target = $region41
    $region40: #{lstm_forward.1} parent=1 // pred_region
      %s2129 = ssub.s32 32, 32
      %2130 = vsyncadd [#allocation3], %s2129
      %s2132 = sshll.u32 [#allocation2], 4
      %s2133 = int_to_ptr.vmem [resolvable:$true] %s2132
      %2135 = dma.vmem_to_hbm [thread:$0]  %s2133, 32, %s9, [#allocation3]
    $region41: #{lstm_forward.1} parent=1 // pred_fallthru
      _
    // Predicated region
    $region42: #{lstm_forward.1} parent=1 // pred_check
      _
    $region43: #{lstm_forward.1} parent=1 // pred_check_branch
      %2137 = sbr.rel (0) target = $region45
    $region44: #{lstm_forward.1} parent=1 // pred_region
      %2138 = dma.done [#allocation3], 32
    $region45: #{lstm_forward.1} parent=1 // pred_fallthru
      _
    %2139 = vsyncpa [#allocation3], 1

</llo_original>
